<compile_context>
chip_gen: v5e
topology: v5e:2x2
jax: 0.10.0
libtpu: 0.0.40
codegen_flags: <defaults>
</compile_context>

<pallas_src>
import math

import jax
import jax.numpy as jnp
import numpy as np
from jax.experimental import pallas as pl
from jax.experimental.pallas import tpu as pltpu

# ----------------------------- model constants ------------------------------
D_MODEL = 32
NUM_HEADS = 4
DEPTH = D_MODEL // NUM_HEADS          # 8
D_FF = 64
V_SRC = 96                            # source vocabulary size
V_TGT = 128                           # target vocabulary size (lane-dense output)
MAX_LEN = 16                          # max_sen_len for the positional encoding
LN_EPS = 1e-5                         # nn.LayerNorm default
NEG_BIG = 1000000000.0                # matches masked_fill(mask == 0, -1e9)

POS_COL_BASE = V_SRC + V_TGT          # PE rows live after both vocabularies
EMB_VOCAB = V_SRC + V_TGT + MAX_LEN   # 240 rows in the fused embedding table

# MXU operand dtype.  fp32 keeps parity with the fp32 reference at these tiny
# shapes (kernel is DMA/overhead bound).  On v6e/v7x flip to jnp.bfloat16 at
# larger shapes (accumulation stays fp32; keep VPU/EUP work in f32 on v5e).
MXU_DTYPE = jnp.float32

# ------------------------- parameter-slab row layout -------------------------
RW_A = 0        # rows   0: 32  [enc Wq | enc Wk | enc Wv | enc Wo]
RW_B = 32       # rows  32: 64  [enc W1 (64) | dec Wq (32) | dec Wo (32)]
RW_C = 64       # rows  64: 96  [dec Wk | dec Wv | dec W1 (64)]
RW_D = 96       # rows  96:128  [out W (32,128)]
RW_E = 128      # rows 128:192  [enc W2 (64,32) | dec W2 (64,32) | pad]
R_BQKV = 192    # [enc bq | enc bk | enc bv | dec bq]
R_B1 = 193      # [enc b1 (64) | dec b1 (64)]
R_BKV = 194     # [dec bk | dec bv | pad]
R_OUTB = 195    # [out b (128)]
R_V1 = 196      # [enc bo | enc ln1 g | enc ln1 b | enc b2]
R_V2 = 197      # [enc ln2 g | enc ln2 b | dec bo | dec ln2 g]
R_V3 = 198      # [dec ln2 b | dec b2 | dec ln3 g | dec ln3 b]
R_EMB = 200     # rows 200:440  [src_emb (96,32); tgt_emb (128,32); pos (16,32)]
SLAB_ROWS = 440


# ------------------------------ kernel helpers -------------------------------
def _mm(a, b):
    return jnp.dot(a.astype(MXU_DTYPE), b.astype(MXU_DTYPE),
                   preferred_element_type=jnp.float32)


def _bmm(spec, a, b):
    return jnp.einsum(spec, a.astype(MXU_DTYPE), b.astype(MXU_DTYPE),
                      preferred_element_type=jnp.float32)


def _layernorm(x, gamma, beta):
    mean = jnp.mean(x, axis=-1, keepdims=True)
    c = x - mean
    var = jnp.mean(c * c, axis=-1, keepdims=True)
    return c * jax.lax.rsqrt(var + LN_EPS) * gamma + beta


def _split_heads(x2, batch, seq):
    """(B*S, H*dep) -> (H*B, S, dep); head-major batch index n = h*B + b."""
    n = batch * seq
    heads = [x2[:, h * DEPTH:(h + 1) * DEPTH].reshape(1, n, DEPTH)
             for h in range(NUM_HEADS)]
    return jnp.concatenate(heads, axis=0).reshape(NUM_HEADS * batch, seq, DEPTH)


def _merge_heads(x3, batch, seq):
    """(H*B, S, dep) -> (B*S, H*dep) == torch's concat of heads along features."""
    n = batch * seq
    x = x3.reshape(NUM_HEADS, n, DEPTH)
    return jnp.concatenate([x[h] for h in range(NUM_HEADS)], axis=-1)


def _mha_core(q2, k2, v2, bias, batch, sq, sk):
    """q2:(B*Sq,32)  k2,v2:(B*Sk,32)  bias:(B,Sq,Sk) -> merged context (B*Sq,32)."""
    q = _split_heads(q2, batch, sq)
    k = _split_heads(k2, batch, sk)
    v = _split_heads(v2, batch, sk)
    sc = _bmm('nqd,nkd->nqk', q, k) * (1.0 / math.sqrt(DEPTH))
    # Broadcasting add of the (B,Sq,Sk) additive mask across heads (no tile copy).
    sc = (sc.reshape(NUM_HEADS, batch, sq, sk) + bias[None]
          ).reshape(NUM_HEADS * batch, sq, sk)
    m = jnp.max(sc, axis=-1, keepdims=True)
    e = jnp.exp(sc - m)
    p = e * pl.reciprocal(jnp.sum(e, axis=-1, keepdims=True), approx=True)
    ctx = _bmm('nqk,nkd->nqd', p, v)              # (H*B, Sq, dep)
    return _merge_heads(ctx, batch, sq)           # (B*Sq, 32)


# --------------------------------- the kernel --------------------------------
def transformer_kernel(tok_ref, bias_ref, slab_ref, out_ref):
    batch, s_all, s_src = bias_ref.shape
    s_tgt = s_all - s_src
    n_src = batch * s_src
    n_tgt = batch * s_tgt
    n_tot = n_src + n_tgt

    def vec32(row, slot):                         # (1, 32) vector parameter
        return slab_ref[row:row + 1, slot * 32:(slot + 1) * 32]

    # -------- fused embeddings + positional encoding: one 2-hot matmul --------
    table = slab_ref[R_EMB:R_EMB + EMB_VOCAB, 0:D_MODEL]          # (240, 32)
    tok_col = tok_ref[:, 0:1]                                     # vocab column
    pos_col = tok_ref[:, 1:2]                                     # PE column
    cols = jax.lax.broadcasted_iota(jnp.int32, (n_tot, EMB_VOCAB), 1)
    two_hot = jnp.logical_or(cols == tok_col, cols == pos_col).astype(jnp.float32)
    emb = _mm(two_hot, table)                                     # tok emb + PE
    src2 = emb[0:n_src]                                           # (B*Ss, 32)
    tgt2 = emb[n_src:n_tot]                                       # (B*St, 32)

    # ----------------- encoder layer (dropout = identity, eval) ---------------
    enc_bias = bias_ref[:, 0:s_src, :]                            # (B, Ss, Ss)
    qkv = (_mm(src2, slab_ref[RW_A:RW_A + 32, 0:96])
           + slab_ref[R_BQKV:R_BQKV + 1, 0:96])                   # (B*Ss, 96)
    ctx = _mha_core(qkv[:, 0:D_MODEL], qkv[:, D_MODEL:2 * D_MODEL],
                    qkv[:, 2 * D_MODEL:3 * D_MODEL], enc_bias, batch, s_src, s_src)
    attn = _mm(ctx, slab_ref[RW_A:RW_A + 32, 96:128]) + vec32(R_V1, 0)
    ffn_in = _layernorm(src2 + attn, vec32(R_V1, 1), vec32(R_V1, 2))
    hid = jnp.maximum(_mm(ffn_in, slab_ref[RW_B:RW_B + 32, 0:64])
                      + slab_ref[R_B1:R_B1 + 1, 0:64], 0.0)
    ffn_out = _mm(hid, slab_ref[RW_E:RW_E + 64, 0:32]) + vec32(R_V1, 3)
    enc_out = _layernorm(ffn_in + ffn_out, vec32(R_V2, 0), vec32(R_V2, 1))

    # ------------------- decoder layer (cross-attention only) -----------------
    # The decoder self-attention branch + layernorm1 are dead code in the torch
    # module (their result is never consumed) -> omitted: no DMAs, no compute.
    cross_bias = bias_ref[:, s_src:s_all, :]                      # (B, St, Ss)
    q_d = (_mm(tgt2, slab_ref[RW_B:RW_B + 32, 64:96])
           + slab_ref[R_BQKV:R_BQKV + 1, 96:128])                 # (B*St, 32)
    kv_d = (_mm(enc_out, slab_ref[RW_C:RW_C + 32, 0:64])
            + slab_ref[R_BKV:R_BKV + 1, 0:64])                    # (B*Ss, 64)
    ctx = _mha_core(q_d, kv_d[:, 0:D_MODEL], kv_d[:, D_MODEL:2 * D_MODEL],
                    cross_bias, batch, s_tgt, s_src)
    ca = _mm(ctx, slab_ref[RW_B:RW_B + 32, 96:128]) + vec32(R_V2, 2)
    # NOTE: ca + ca (not x + ca) faithfully reproduces the torch module.
    ffn_in = _layernorm(ca + ca, vec32(R_V2, 3), vec32(R_V3, 0))
    hid = jnp.maximum(_mm(ffn_in, slab_ref[RW_C:RW_C + 32, 64:128])
                      + slab_ref[R_B1:R_B1 + 1, 64:128], 0.0)
    ffn_out = _mm(hid, slab_ref[RW_E:RW_E + 64, 32:64]) + vec32(R_V3, 1)
    dec_out = _layernorm(ffn_in + ffn_out, vec32(R_V3, 2), vec32(R_V3, 3))

    # --------------- final projection + log_softmax (128 lanes) ---------------
    logits = _mm(dec_out, slab_ref[RW_D:RW_D + 32, :]) + slab_ref[R_OUTB:R_OUTB + 1, :]
    m = jnp.max(logits, axis=-1, keepdims=True)
    lse = m + jnp.log(jnp.sum(jnp.exp(logits - m), axis=-1, keepdims=True))
    out_ref[...] = logits - lse


# ------------------------------ host-side helpers ----------------------------
def positional_encoding(max_len, d_model):
    pos = jnp.arange(max_len, dtype=jnp.float32)[:, None]
    i = jnp.arange(d_model)[None, :]
    angle_rates = 1.0 / jnp.power(10000.0, (2 * (i // 2)).astype(jnp.float32) / d_model)
    ang = pos * angle_rates
    pe = ang.at[:, 0::2].set(jnp.sin(ang[:, 0::2]))
    pe = pe.at[:, 1::2].set(jnp.cos(ang[:, 1::2]))
    return pe                                      # (max_len, d_model)


def _pack_slab(p):
    """Pack every parameter (incl. embedding tables + PE) into one (440,128) slab."""
    s = np.zeros((SLAB_ROWS, 128), np.float32)
    a = lambda k: np.asarray(p[k], np.float32)

    s[RW_A:RW_A + 32, 0:32] = a('enc_wq')
    s[RW_A:RW_A + 32, 32:64] = a('enc_wk')
    s[RW_A:RW_A + 32, 64:96] = a('enc_wv')
    s[RW_A:RW_A + 32, 96:128] = a('enc_wo')
    s[RW_B:RW_B + 32, 0:64] = a('enc_w1')
    s[RW_B:RW_B + 32, 64:96] = a('dec_wq')
    s[RW_B:RW_B + 32, 96:128] = a('dec_wo')
    s[RW_C:RW_C + 32, 0:32] = a('dec_wk')
    s[RW_C:RW_C + 32, 32:64] = a('dec_wv')
    s[RW_C:RW_C + 32, 64:128] = a('dec_w1')
    s[RW_D:RW_D + 32, 0:128] = a('out_w')
    s[RW_E:RW_E + 64, 0:32] = a('enc_w2')
    s[RW_E:RW_E + 64, 32:64] = a('dec_w2')

    s[R_BQKV, 0:32] = a('enc_bq'); s[R_BQKV, 32:64] = a('enc_bk')
    s[R_BQKV, 64:96] = a('enc_bv'); s[R_BQKV, 96:128] = a('dec_bq')
    s[R_B1, 0:64] = a('enc_b1'); s[R_B1, 64:128] = a('dec_b1')
    s[R_BKV, 0:32] = a('dec_bk'); s[R_BKV, 32:64] = a('dec_bv')
    s[R_OUTB, 0:128] = a('out_b')
    s[R_V1, 0:32] = a('enc_bo'); s[R_V1, 32:64] = a('enc_ln1_g')
    s[R_V1, 64:96] = a('enc_ln1_b'); s[R_V1, 96:128] = a('enc_b2')
    s[R_V2, 0:32] = a('enc_ln2_g'); s[R_V2, 32:64] = a('enc_ln2_b')
    s[R_V2, 64:96] = a('dec_bo'); s[R_V2, 96:128] = a('dec_ln2_g')
    s[R_V3, 0:32] = a('dec_ln2_b'); s[R_V3, 32:64] = a('dec_b2')
    s[R_V3, 64:96] = a('dec_ln3_g'); s[R_V3, 96:128] = a('dec_ln3_b')

    s[R_EMB:R_EMB + V_SRC, 0:D_MODEL] = a('src_emb')
    s[R_EMB + V_SRC:R_EMB + V_SRC + V_TGT, 0:D_MODEL] = a('tgt_emb')
    s[R_EMB + POS_COL_BASE:R_EMB + POS_COL_BASE + MAX_LEN, 0:D_MODEL] = np.asarray(
        positional_encoding(MAX_LEN, D_MODEL), np.float32)
    return jnp.asarray(s)


def transformer_forward(x_tok, y_tok, src_padding_mask, tgt_padding_mask,
                        tgt_look_ahead_mask, params):
    """Pallas forward of the torch `Transformer` module (eval mode)."""
    del tgt_look_ahead_mask   # only feeds the dead decoder self-attention branch
    batch, s_src = x_tok.shape
    s_tgt = y_tok.shape[1]
    n_src, n_tgt = batch * s_src, batch * s_tgt

    # (vocab column, PE column) per token row; tgt vocab offset by V_SRC.
    src_cols = jnp.stack(
        [x_tok.reshape(n_src),
         jnp.tile(jnp.arange(s_src, dtype=jnp.int32), batch) + POS_COL_BASE], axis=1)
    tgt_cols = jnp.stack(
        [y_tok.reshape(n_tgt) + V_SRC,
         jnp.tile(jnp.arange(s_tgt, dtype=jnp.int32), batch) + POS_COL_BASE], axis=1)
    tok_pos = jnp.concatenate([src_cols, tgt_cols], axis=0).astype(jnp.int32)

    # 0/1 keep-masks -> additive biases, shared across heads, packed into one ref.
    enc_bias = (src_padding_mask.reshape(batch, s_src, s_src).astype(jnp.float32)
                - 1.0) * NEG_BIG
    cross_bias = (tgt_padding_mask.reshape(batch, s_tgt, s_src).astype(jnp.float32)
                  - 1.0) * NEG_BIG
    bias = jnp.concatenate([enc_bias, cross_bias], axis=1)   # (B, Ss+St, Ss)

    slab = _pack_slab(params)                                # (440, 128) f32

    inputs = [tok_pos, bias, slab]

    def full_block(a):
        return pl.BlockSpec(a.shape, lambda i, nd=a.ndim: (0,) * nd)

    out2 = pl.pallas_call(
        transformer_kernel,
        out_shape=jax.ShapeDtypeStruct((n_tgt, V_TGT), jnp.float32),
        grid_spec=pltpu.PrefetchScalarGridSpec(
            num_scalar_prefetch=0,
            grid=(1,),                    # whole model / whole batch in one step
            in_specs=[full_block(a) for a in inputs],
            out_specs=pl.BlockSpec((n_tgt, V_TGT), lambda i: (0, 0)),
        ),
        # Single grid step: at real shapes add a leading "parallel" batch/seq
        # axis so both v7x TensorCores are used, and re-derive tiles for the
        # smaller 64 MiB v7x VMEM.
        compiler_params=pltpu.CompilerParams(dimension_semantics=("arbitrary",)),
    )(*inputs)
    return out2.reshape(batch, s_tgt, V_TGT)


# --------------------------- pure-JAX reference ------------------------------
def _ref_mha(p, prefix, q_in, k_in, v_in, mask):
    batch, sq, _ = q_in.shape
    sk = k_in.shape[1]

    def lin(t, w, b):
        return t @ w + b

    def split(t, s):
        return t.reshape(batch, s, NUM_HEADS, DEPTH).transpose(0, 2, 1, 3)

    q = split(lin(q_in, p[prefix + 'wq'], p[prefix + 'bq']), sq)
    k = split(lin(k_in, p[prefix + 'wk'], p[prefix + 'bk']), sk)
    v = split(lin(v_in, p[prefix + 'wv'], p[prefix + 'bv']), sk)
    sc = q @ jnp.swapaxes(k, -1, -2) / math.sqrt(DEPTH)
    sc = jnp.where(mask == 0, -NEG_BIG, sc)
    attn = jax.nn.softmax(sc, axis=-1)
    o = (attn @ v).transpose(0, 2, 1, 3).reshape(batch, sq, D_MODEL)
    return o @ p[prefix + 'wo'] + p[prefix + 'bo']


def _ref_ln(x, g, b):
    mean = jnp.mean(x, axis=-1, keepdims=True)
    var = jnp.mean((x - mean) ** 2, axis=-1, keepdims=True)
    return (x - mean) / jnp.sqrt(var + LN_EPS) * g + b


def _ref_ffn(x, w1, b1, w2, b2):
    return jnp.maximum(x @ w1 + b1, 0.0) @ w2 + b2


def ref_transformer(x_tok, y_tok, src_padding_mask, tgt_padding_mask,
                    tgt_look_ahead_mask, p):
    del tgt_look_ahead_mask   # decoder self-attention output is never consumed
    s_src, s_tgt = x_tok.shape[1], y_tok.shape[1]
    pe = positional_encoding(MAX_LEN, D_MODEL)
    src = p['src_emb'][x_tok] + pe[None, :s_src, :]
    tgt = p['tgt_emb'][y_tok] + pe[None, :s_tgt, :]

    # EncoderLayer
    attn = _ref_mha(p, 'enc_', src, src, src, src_padding_mask)
    ffn_in = _ref_ln(src + attn, p['enc_ln1_g'], p['enc_ln1_b'])
    ffn_out = _ref_ffn(ffn_in, p['enc_w1'], p['enc_b1'], p['enc_w2'], p['enc_b2'])
    enc_out = _ref_ln(ffn_in + ffn_out, p['enc_ln2_g'], p['enc_ln2_b'])

    # DecoderLayer (self-attention branch is dead code in the torch module)
    ca = _ref_mha(p, 'dec_', tgt, enc_out, enc_out, tgt_padding_mask)
    ffn_in = _ref_ln(ca + ca, p['dec_ln2_g'], p['dec_ln2_b'])
    ffn_out = _ref_ffn(ffn_in, p['dec_w1'], p['dec_b1'], p['dec_w2'], p['dec_b2'])
    dec_out = _ref_ln(ffn_in + ffn_out, p['dec_ln3_g'], p['dec_ln3_b'])

    logits = dec_out @ p['out_w'] + p['out_b']
    return jax.nn.log_softmax(logits, axis=-1)


# ------------------------------ parameter init -------------------------------
def make_params(key):
    keys = iter(jax.random.split(key, 40))
    nk = lambda: next(keys)

    def dense(fan_in, fan_out):
        w = jax.random.normal(nk(), (fan_in, fan_out), jnp.float32) * 0.08
        b = jax.random.normal(nk(), (fan_out,), jnp.float32) * 0.05
        return w, b

    def ln():
        g = 1.0 + 0.02 * jax.random.normal(nk(), (D_MODEL,), jnp.float32)
        b = 0.02 * jax.random.normal(nk(), (D_MODEL,), jnp.float32)
        return g, b

    p = {}
    p['src_emb'] = jax.random.normal(nk(), (V_SRC, D_MODEL), jnp.float32) * 0.3
    p['tgt_emb'] = jax.random.normal(nk(), (V_TGT, D_MODEL), jnp.float32) * 0.3
    # Only parameters that affect the output: the decoder's dead self-attention
    # and layernorm1 are not created.
    for pre in ('enc_', 'dec_'):
        for nm in ('wq', 'wk', 'wv', 'wo'):
            w, b = dense(D_MODEL, D_MODEL)
            p[pre + nm] = w
            p[pre + 'b' + nm[1]] = b
        p[pre + 'w1'], p[pre + 'b1'] = dense(D_MODEL, D_FF)
        p[pre + 'w2'], p[pre + 'b2'] = dense(D_FF, D_MODEL)
    for name in ('enc_ln1', 'enc_ln2', 'dec_ln2', 'dec_ln3'):
        g, b = ln()
        p[name + '_g'], p[name + '_b'] = g, b
    p['out_w'], p['out_b'] = dense(D_MODEL, V_TGT)
    return p


# ----------------------------------- main -------------------------------------
if __name__ == "__main__":
    B, S_SRC, S_TGT = 2, 8, 8
    key = jax.random.PRNGKey(0)
    k_x, k_y, k_par = jax.random.split(key, 3)

    x_tok = jax.random.randint(k_x, (B, S_SRC), 0, V_SRC, dtype=jnp.int32)
    y_tok = jax.random.randint(k_y, (B, S_TGT), 0, V_TGT, dtype=jnp.int32)

    # 1 = keep, 0 = mask.  Batch 1 masks the last two source positions.
    src_pad = jnp.ones((B, 1, S_SRC, S_SRC), jnp.float32).at[1, :, :, S_SRC - 2:].set(0.0)
    tgt_pad = jnp.ones((B, 1, S_TGT, S_SRC), jnp.float32).at[1, :, :, S_SRC - 2:].set(0.0)
    tgt_la = jnp.broadcast_to(jnp.tril(jnp.ones((S_TGT, S_TGT), jnp.float32)),
                              (B, 1, S_TGT, S_TGT))

    params = make_params(k_par)

    out = transformer_forward(x_tok, y_tok, src_pad, tgt_pad, tgt_la, params)
    out = jax.block_until_ready(out)

    ref = ref_transformer(x_tok, y_tok, src_pad, tgt_pad, tgt_la, params)
    # Tolerance 2e-3: pl.reciprocal(approx=True) in the softmax denominator and
    # default-precision f32 MXU matmuls introduce small (<~1e-3) deviations.
    np.testing.assert_allclose(np.asarray(out), np.asarray(ref), rtol=2e-3, atol=2e-3)

    print("KERNEL_OK")
</pallas_src>

<mosaic_0001>
module attributes {stable_mosaic.version = 11 : i64} {
  func.func @transformer_kernel(%arg0: i32, %arg1: memref<32x2xi32, #tpu.memory_space<vmem>>, %arg2: memref<2x16x8xf32, #tpu.memory_space<vmem>>, %arg3: memref<440x128xf32, #tpu.memory_space<vmem>>, %arg4: memref<16x128xf32, #tpu.memory_space<vmem>>) attributes {dimension_semantics = [#tpu.dimension_semantics<arbitrary>], iteration_bounds = array<i64: 1>, scalar_prefetch = 0 : i64, scratch_operands = 0 : i64, tpu.core_type = #tpu.core_type<tc>, window_params = [{pipeline_mode = #tpu.pipeline_mode<synchronous>, transform_indices = @transform_0, window_bounds = array<i64: 32, 2>}, {pipeline_mode = #tpu.pipeline_mode<synchronous>, transform_indices = @transform_1, window_bounds = array<i64: 2, 16, 8>}, {pipeline_mode = #tpu.pipeline_mode<synchronous>, transform_indices = @transform_2, window_bounds = array<i64: 440, 128>}, {pipeline_mode = #tpu.pipeline_mode<synchronous>, transform_indices = @transform_3, window_bounds = array<i64: 16, 128>}]} {
    %c200 = arith.constant 200 : index
    %c0 = arith.constant 0 : index
    %0 = vector.load %arg3[%c200, %c0] : memref<440x128xf32, #tpu.memory_space<vmem>>, vector<240x32xf32>
    %c0_0 = arith.constant 0 : index
    %c0_1 = arith.constant 0 : index
    %1 = vector.load %arg1[%c0_0, %c0_1] : memref<32x2xi32, #tpu.memory_space<vmem>>, vector<32x1xi32>
    %c0_2 = arith.constant 0 : index
    %c1 = arith.constant 1 : index
    %2 = vector.load %arg1[%c0_2, %c1] : memref<32x2xi32, #tpu.memory_space<vmem>>, vector<32x1xi32>
    %3 = tpu.iota {dimensions = array<i32: 1>} : vector<32x240xi32>
    %4 = vector.broadcast %1 : vector<32x1xi32> to vector<32x240xi32>
    %5 = arith.cmpi eq, %3, %4 : vector<32x240xi32>
    %6 = vector.broadcast %2 : vector<32x1xi32> to vector<32x240xi32>
    %7 = arith.cmpi eq, %3, %6 : vector<32x240xi32>
    %8 = arith.ori %5, %7 : vector<32x240xi1>
    %9 = arith.extui %8 : vector<32x240xi1> to vector<32x240xi32>
    %10 = arith.sitofp %9 : vector<32x240xi32> to vector<32x240xf32>
    %cst = arith.constant dense<0.000000e+00> : vector<32x32xf32>
    %11 = tpu.matmul %10, %0, %cst {dimension_numbers = #tpu.dot_dimension_numbers<[1], [0], [0], [1], [0, 0, 1, 1], [], []>} : vector<32x240xf32>, vector<240x32xf32>, vector<32x32xf32> -> vector<32x32xf32>
    %12 = vector.extract_strided_slice %11 {offsets = [0, 0], sizes = [16, 32], strides = [1, 1]} : vector<32x32xf32> to vector<16x32xf32>
    %13 = vector.extract_strided_slice %11 {offsets = [16, 0], sizes = [16, 32], strides = [1, 1]} : vector<32x32xf32> to vector<16x32xf32>
    %c0_3 = arith.constant 0 : index
    %c0_4 = arith.constant 0 : index
    %c0_5 = arith.constant 0 : index
    %14 = vector.load %arg2[%c0_3, %c0_4, %c0_5] : memref<2x16x8xf32, #tpu.memory_space<vmem>>, vector<2x8x8xf32>
    %c0_6 = arith.constant 0 : index
    %c0_7 = arith.constant 0 : index
    %15 = vector.load %arg3[%c0_6, %c0_7] : memref<440x128xf32, #tpu.memory_space<vmem>>, vector<32x96xf32>
    %cst_8 = arith.constant dense<0.000000e+00> : vector<16x96xf32>
    %16 = tpu.matmul %12, %15, %cst_8 {dimension_numbers = #tpu.dot_dimension_numbers<[1], [0], [0], [1], [0, 0, 1, 1], [], []>} : vector<16x32xf32>, vector<32x96xf32>, vector<16x96xf32> -> vector<16x96xf32>
    %c192 = arith.constant 192 : index
    %c0_9 = arith.constant 0 : index
    %17 = vector.load %arg3[%c192, %c0_9] : memref<440x128xf32, #tpu.memory_space<vmem>>, vector<1x96xf32>
    %18 = vector.broadcast %17 : vector<1x96xf32> to vector<16x96xf32>
    %19 = arith.addf %16, %18 : vector<16x96xf32>
    %20 = vector.extract_strided_slice %19 {offsets = [0, 0], sizes = [16, 32], strides = [1, 1]} : vector<16x96xf32> to vector<16x32xf32>
    %21 = vector.extract_strided_slice %19 {offsets = [0, 32], sizes = [16, 32], strides = [1, 1]} : vector<16x96xf32> to vector<16x32xf32>
    %22 = vector.extract_strided_slice %19 {offsets = [0, 64], sizes = [16, 32], strides = [1, 1]} : vector<16x96xf32> to vector<16x32xf32>
    %23 = vector.extract_strided_slice %20 {offsets = [0, 0], sizes = [16, 8], strides = [1, 1]} : vector<16x32xf32> to vector<16x8xf32>
    %24 = vector.shape_cast %23 : vector<16x8xf32> to vector<1x16x8xf32>
    %25 = vector.extract_strided_slice %20 {offsets = [0, 8], sizes = [16, 8], strides = [1, 1]} : vector<16x32xf32> to vector<16x8xf32>
    %26 = vector.shape_cast %25 : vector<16x8xf32> to vector<1x16x8xf32>
    %27 = vector.extract_strided_slice %20 {offsets = [0, 16], sizes = [16, 8], strides = [1, 1]} : vector<16x32xf32> to vector<16x8xf32>
    %28 = vector.shape_cast %27 : vector<16x8xf32> to vector<1x16x8xf32>
    %29 = vector.extract_strided_slice %20 {offsets = [0, 24], sizes = [16, 8], strides = [1, 1]} : vector<16x32xf32> to vector<16x8xf32>
    %30 = vector.shape_cast %29 : vector<16x8xf32> to vector<1x16x8xf32>
    %31 = tpu.concatenate %24, %26, %28, %30 in 0 : vector<1x16x8xf32>, vector<1x16x8xf32>, vector<1x16x8xf32>, vector<1x16x8xf32> -> vector<4x16x8xf32>
    %32 = vector.shape_cast %31 : vector<4x16x8xf32> to vector<8x8x8xf32>
    %33 = vector.extract_strided_slice %21 {offsets = [0, 0], sizes = [16, 8], strides = [1, 1]} : vector<16x32xf32> to vector<16x8xf32>
    %34 = vector.shape_cast %33 : vector<16x8xf32> to vector<1x16x8xf32>
    %35 = vector.extract_strided_slice %21 {offsets = [0, 8], sizes = [16, 8], strides = [1, 1]} : vector<16x32xf32> to vector<16x8xf32>
    %36 = vector.shape_cast %35 : vector<16x8xf32> to vector<1x16x8xf32>
    %37 = vector.extract_strided_slice %21 {offsets = [0, 16], sizes = [16, 8], strides = [1, 1]} : vector<16x32xf32> to vector<16x8xf32>
    %38 = vector.shape_cast %37 : vector<16x8xf32> to vector<1x16x8xf32>
    %39 = vector.extract_strided_slice %21 {offsets = [0, 24], sizes = [16, 8], strides = [1, 1]} : vector<16x32xf32> to vector<16x8xf32>
    %40 = vector.shape_cast %39 : vector<16x8xf32> to vector<1x16x8xf32>
    %41 = tpu.concatenate %34, %36, %38, %40 in 0 : vector<1x16x8xf32>, vector<1x16x8xf32>, vector<1x16x8xf32>, vector<1x16x8xf32> -> vector<4x16x8xf32>
    %42 = vector.shape_cast %41 : vector<4x16x8xf32> to vector<8x8x8xf32>
    %43 = vector.extract_strided_slice %22 {offsets = [0, 0], sizes = [16, 8], strides = [1, 1]} : vector<16x32xf32> to vector<16x8xf32>
    %44 = vector.shape_cast %43 : vector<16x8xf32> to vector<1x16x8xf32>
    %45 = vector.extract_strided_slice %22 {offsets = [0, 8], sizes = [16, 8], strides = [1, 1]} : vector<16x32xf32> to vector<16x8xf32>
    %46 = vector.shape_cast %45 : vector<16x8xf32> to vector<1x16x8xf32>
    %47 = vector.extract_strided_slice %22 {offsets = [0, 16], sizes = [16, 8], strides = [1, 1]} : vector<16x32xf32> to vector<16x8xf32>
    %48 = vector.shape_cast %47 : vector<16x8xf32> to vector<1x16x8xf32>
    %49 = vector.extract_strided_slice %22 {offsets = [0, 24], sizes = [16, 8], strides = [1, 1]} : vector<16x32xf32> to vector<16x8xf32>
    %50 = vector.shape_cast %49 : vector<16x8xf32> to vector<1x16x8xf32>
    %51 = tpu.concatenate %44, %46, %48, %50 in 0 : vector<1x16x8xf32>, vector<1x16x8xf32>, vector<1x16x8xf32>, vector<1x16x8xf32> -> vector<4x16x8xf32>
    %52 = vector.shape_cast %51 : vector<4x16x8xf32> to vector<8x8x8xf32>
    "tpu.trace_start"() <{level = 10 : i32, message = "nqd,nkd->nqk"}> : () -> ()
    %cst_10 = arith.constant dense<0.000000e+00> : vector<8x8x8xf32>
    %53 = tpu.matmul %32, %42, %cst_10 {dimension_numbers = #tpu.dot_dimension_numbers<[2], [2], [1], [1], [0, 0, 0, 1, 1, 1], [0], [0]>} : vector<8x8x8xf32>, vector<8x8x8xf32>, vector<8x8x8xf32> -> vector<8x8x8xf32>
    "tpu.trace_stop"() : () -> ()
    %cst_11 = arith.constant 0.353553385 : f32
    %54 = vector.broadcast %cst_11 : f32 to vector<8x8x8xf32>
    %55 = arith.mulf %53, %54 : vector<8x8x8xf32>
    %56 = vector.shape_cast %55 : vector<8x8x8xf32> to vector<4x2x8x8xf32>
    %57 = vector.shape_cast %14 : vector<2x8x8xf32> to vector<1x2x8x8xf32>
    %58 = vector.broadcast %57 : vector<1x2x8x8xf32> to vector<4x2x8x8xf32>
    %59 = arith.addf %56, %58 : vector<4x2x8x8xf32>
    %60 = vector.shape_cast %59 : vector<4x2x8x8xf32> to vector<8x8x8xf32>
    %cst_12 = arith.constant dense<0xFF800000> : vector<8x8xf32>
    %61 = vector.multi_reduction <maximumf>, %60, %cst_12 [2] : vector<8x8x8xf32> to vector<8x8xf32>
    %62 = vector.shape_cast %61 : vector<8x8xf32> to vector<8x8x1xf32>
    %63 = vector.broadcast %62 : vector<8x8x1xf32> to vector<8x8x8xf32>
    %64 = arith.subf %60, %63 : vector<8x8x8xf32>
    %65 = math.exp %64 : vector<8x8x8xf32>
    %cst_13 = arith.constant dense<0.000000e+00> : vector<8x8xf32>
    %66 = vector.multi_reduction <add>, %65, %cst_13 [2] : vector<8x8x8xf32> to vector<8x8xf32>
    %67 = vector.shape_cast %66 : vector<8x8xf32> to vector<8x8x1xf32>
    %68 = tpu.reciprocal %67 {approx = true} : vector<8x8x1xf32> -> vector<8x8x1xf32>
    %69 = vector.broadcast %68 : vector<8x8x1xf32> to vector<8x8x8xf32>
    %70 = arith.mulf %65, %69 : vector<8x8x8xf32>
    "tpu.trace_start"() <{level = 10 : i32, message = "nqk,nkd->nqd"}> : () -> ()
    %cst_14 = arith.constant dense<0.000000e+00> : vector<8x8x8xf32>
    %71 = tpu.matmul %70, %52, %cst_14 {dimension_numbers = #tpu.dot_dimension_numbers<[2], [1], [1], [2], [0, 0, 0, 1, 1, 2], [0], [0]>} : vector<8x8x8xf32>, vector<8x8x8xf32>, vector<8x8x8xf32> -> vector<8x8x8xf32>
    "tpu.trace_stop"() : () -> ()
    %72 = vector.shape_cast %71 : vector<8x8x8xf32> to vector<4x16x8xf32>
    %73 = vector.extract_strided_slice %72 {offsets = [0, 0, 0], sizes = [1, 16, 8], strides = [1, 1, 1]} : vector<4x16x8xf32> to vector<1x16x8xf32>
    %74 = vector.shape_cast %73 : vector<1x16x8xf32> to vector<16x8xf32>
    %75 = vector.extract_strided_slice %72 {offsets = [1, 0, 0], sizes = [1, 16, 8], strides = [1, 1, 1]} : vector<4x16x8xf32> to vector<1x16x8xf32>
    %76 = vector.shape_cast %75 : vector<1x16x8xf32> to vector<16x8xf32>
    %77 = vector.extract_strided_slice %72 {offsets = [2, 0, 0], sizes = [1, 16, 8], strides = [1, 1, 1]} : vector<4x16x8xf32> to vector<1x16x8xf32>
    %78 = vector.shape_cast %77 : vector<1x16x8xf32> to vector<16x8xf32>
    %79 = vector.extract_strided_slice %72 {offsets = [3, 0, 0], sizes = [1, 16, 8], strides = [1, 1, 1]} : vector<4x16x8xf32> to vector<1x16x8xf32>
    %80 = vector.shape_cast %79 : vector<1x16x8xf32> to vector<16x8xf32>
    %81 = tpu.concatenate %74, %76, %78, %80 in 1 : vector<16x8xf32>, vector<16x8xf32>, vector<16x8xf32>, vector<16x8xf32> -> vector<16x32xf32>
    %c0_15 = arith.constant 0 : index
    %c96 = arith.constant 96 : index
    %82 = vector.load %arg3[%c0_15, %c96] : memref<440x128xf32, #tpu.memory_space<vmem>>, vector<32x32xf32>
    %cst_16 = arith.constant dense<0.000000e+00> : vector<16x32xf32>
    %83 = tpu.matmul %81, %82, %cst_16 {dimension_numbers = #tpu.dot_dimension_numbers<[1], [0], [0], [1], [0, 0, 1, 1], [], []>} : vector<16x32xf32>, vector<32x32xf32>, vector<16x32xf32> -> vector<16x32xf32>
    %c196 = arith.constant 196 : index
    %c0_17 = arith.constant 0 : index
    %84 = vector.load %arg3[%c196, %c0_17] : memref<440x128xf32, #tpu.memory_space<vmem>>, vector<1x32xf32>
    %85 = vector.broadcast %84 : vector<1x32xf32> to vector<16x32xf32>
    %86 = arith.addf %83, %85 : vector<16x32xf32>
    %87 = arith.addf %12, %86 : vector<16x32xf32>
    %c196_18 = arith.constant 196 : index
    %c32 = arith.constant 32 : index
    %88 = vector.load %arg3[%c196_18, %c32] : memref<440x128xf32, #tpu.memory_space<vmem>>, vector<1x32xf32>
    %c196_19 = arith.constant 196 : index
    %c64 = arith.constant 64 : index
    %89 = vector.load %arg3[%c196_19, %c64] : memref<440x128xf32, #tpu.memory_space<vmem>>, vector<1x32xf32>
    %cst_20 = arith.constant dense<0.000000e+00> : vector<16xf32>
    %90 = vector.multi_reduction <add>, %87, %cst_20 [1] : vector<16x32xf32> to vector<16xf32>
    %91 = vector.shape_cast %90 : vector<16xf32> to vector<16x1xf32>
    %cst_21 = arith.constant 3.200000e+01 : f32
    %92 = vector.broadcast %cst_21 : f32 to vector<16x1xf32>
    %93 = arith.divf %91, %92 : vector<16x1xf32>
    %94 = vector.broadcast %93 : vector<16x1xf32> to vector<16x32xf32>
    %95 = arith.subf %87, %94 : vector<16x32xf32>
    %96 = arith.mulf %95, %95 : vector<16x32xf32>
    %cst_22 = arith.constant dense<0.000000e+00> : vector<16xf32>
    %97 = vector.multi_reduction <add>, %96, %cst_22 [1] : vector<16x32xf32> to vector<16xf32>
    %98 = vector.shape_cast %97 : vector<16xf32> to vector<16x1xf32>
    %cst_23 = arith.constant 3.200000e+01 : f32
    %99 = vector.broadcast %cst_23 : f32 to vector<16x1xf32>
    %100 = arith.divf %98, %99 : vector<16x1xf32>
    %cst_24 = arith.constant 9.99999974E-6 : f32
    %101 = vector.broadcast %cst_24 : f32 to vector<16x1xf32>
    %102 = arith.addf %100, %101 : vector<16x1xf32>
    %103 = math.rsqrt %102 : vector<16x1xf32>
    %104 = vector.broadcast %103 : vector<16x1xf32> to vector<16x32xf32>
    %105 = arith.mulf %95, %104 : vector<16x32xf32>
    %106 = vector.broadcast %88 : vector<1x32xf32> to vector<16x32xf32>
    %107 = arith.mulf %105, %106 : vector<16x32xf32>
    %108 = vector.broadcast %89 : vector<1x32xf32> to vector<16x32xf32>
    %109 = arith.addf %107, %108 : vector<16x32xf32>
    %c32_25 = arith.constant 32 : index
    %c0_26 = arith.constant 0 : index
    %110 = vector.load %arg3[%c32_25, %c0_26] : memref<440x128xf32, #tpu.memory_space<vmem>>, vector<32x64xf32>
    %cst_27 = arith.constant dense<0.000000e+00> : vector<16x64xf32>
    %111 = tpu.matmul %109, %110, %cst_27 {dimension_numbers = #tpu.dot_dimension_numbers<[1], [0], [0], [1], [0, 0, 1, 1], [], []>} : vector<16x32xf32>, vector<32x64xf32>, vector<16x64xf32> -> vector<16x64xf32>
    %c193 = arith.constant 193 : index
    %c0_28 = arith.constant 0 : index
    %112 = vector.load %arg3[%c193, %c0_28] : memref<440x128xf32, #tpu.memory_space<vmem>>, vector<1x64xf32>
    %113 = vector.broadcast %112 : vector<1x64xf32> to vector<16x64xf32>
    %114 = arith.addf %111, %113 : vector<16x64xf32>
    %cst_29 = arith.constant 0.000000e+00 : f32
    %115 = vector.broadcast %cst_29 : f32 to vector<16x64xf32>
    %116 = arith.maximumf %114, %115 : vector<16x64xf32>
    %c128 = arith.constant 128 : index
    %c0_30 = arith.constant 0 : index
    %117 = vector.load %arg3[%c128, %c0_30] : memref<440x128xf32, #tpu.memory_space<vmem>>, vector<64x32xf32>
    %cst_31 = arith.constant dense<0.000000e+00> : vector<16x32xf32>
    %118 = tpu.matmul %116, %117, %cst_31 {dimension_numbers = #tpu.dot_dimension_numbers<[1], [0], [0], [1], [0, 0, 1, 1], [], []>} : vector<16x64xf32>, vector<64x32xf32>, vector<16x32xf32> -> vector<16x32xf32>
    %c196_32 = arith.constant 196 : index
    %c96_33 = arith.constant 96 : index
    %119 = vector.load %arg3[%c196_32, %c96_33] : memref<440x128xf32, #tpu.memory_space<vmem>>, vector<1x32xf32>
    %120 = vector.broadcast %119 : vector<1x32xf32> to vector<16x32xf32>
    %121 = arith.addf %118, %120 : vector<16x32xf32>
    %122 = arith.addf %109, %121 : vector<16x32xf32>
    %c197 = arith.constant 197 : index
    %c0_34 = arith.constant 0 : index
    %123 = vector.load %arg3[%c197, %c0_34] : memref<440x128xf32, #tpu.memory_space<vmem>>, vector<1x32xf32>
    %c197_35 = arith.constant 197 : index
    %c32_36 = arith.constant 32 : index
    %124 = vector.load %arg3[%c197_35, %c32_36] : memref<440x128xf32, #tpu.memory_space<vmem>>, vector<1x32xf32>
    %cst_37 = arith.constant dense<0.000000e+00> : vector<16xf32>
    %125 = vector.multi_reduction <add>, %122, %cst_37 [1] : vector<16x32xf32> to vector<16xf32>
    %126 = vector.shape_cast %125 : vector<16xf32> to vector<16x1xf32>
    %cst_38 = arith.constant 3.200000e+01 : f32
    %127 = vector.broadcast %cst_38 : f32 to vector<16x1xf32>
    %128 = arith.divf %126, %127 : vector<16x1xf32>
    %129 = vector.broadcast %128 : vector<16x1xf32> to vector<16x32xf32>
    %130 = arith.subf %122, %129 : vector<16x32xf32>
    %131 = arith.mulf %130, %130 : vector<16x32xf32>
    %cst_39 = arith.constant dense<0.000000e+00> : vector<16xf32>
    %132 = vector.multi_reduction <add>, %131, %cst_39 [1] : vector<16x32xf32> to vector<16xf32>
    %133 = vector.shape_cast %132 : vector<16xf32> to vector<16x1xf32>
    %cst_40 = arith.constant 3.200000e+01 : f32
    %134 = vector.broadcast %cst_40 : f32 to vector<16x1xf32>
    %135 = arith.divf %133, %134 : vector<16x1xf32>
    %cst_41 = arith.constant 9.99999974E-6 : f32
    %136 = vector.broadcast %cst_41 : f32 to vector<16x1xf32>
    %137 = arith.addf %135, %136 : vector<16x1xf32>
    %138 = math.rsqrt %137 : vector<16x1xf32>
    %139 = vector.broadcast %138 : vector<16x1xf32> to vector<16x32xf32>
    %140 = arith.mulf %130, %139 : vector<16x32xf32>
    %141 = vector.broadcast %123 : vector<1x32xf32> to vector<16x32xf32>
    %142 = arith.mulf %140, %141 : vector<16x32xf32>
    %143 = vector.broadcast %124 : vector<1x32xf32> to vector<16x32xf32>
    %144 = arith.addf %142, %143 : vector<16x32xf32>
    %c0_42 = arith.constant 0 : index
    %c8 = arith.constant 8 : index
    %c0_43 = arith.constant 0 : index
    %145 = vector.load %arg2[%c0_42, %c8, %c0_43] : memref<2x16x8xf32, #tpu.memory_space<vmem>>, vector<2x8x8xf32>
    %c32_44 = arith.constant 32 : index
    %c64_45 = arith.constant 64 : index
    %146 = vector.load %arg3[%c32_44, %c64_45] : memref<440x128xf32, #tpu.memory_space<vmem>>, vector<32x32xf32>
    %cst_46 = arith.constant dense<0.000000e+00> : vector<16x32xf32>
    %147 = tpu.matmul %13, %146, %cst_46 {dimension_numbers = #tpu.dot_dimension_numbers<[1], [0], [0], [1], [0, 0, 1, 1], [], []>} : vector<16x32xf32>, vector<32x32xf32>, vector<16x32xf32> -> vector<16x32xf32>
    %c192_47 = arith.constant 192 : index
    %c96_48 = arith.constant 96 : index
    %148 = vector.load %arg3[%c192_47, %c96_48] : memref<440x128xf32, #tpu.memory_space<vmem>>, vector<1x32xf32>
    %149 = vector.broadcast %148 : vector<1x32xf32> to vector<16x32xf32>
    %150 = arith.addf %147, %149 : vector<16x32xf32>
    %c64_49 = arith.constant 64 : index
    %c0_50 = arith.constant 0 : index
    %151 = vector.load %arg3[%c64_49, %c0_50] : memref<440x128xf32, #tpu.memory_space<vmem>>, vector<32x64xf32>
    %cst_51 = arith.constant dense<0.000000e+00> : vector<16x64xf32>
    %152 = tpu.matmul %144, %151, %cst_51 {dimension_numbers = #tpu.dot_dimension_numbers<[1], [0], [0], [1], [0, 0, 1, 1], [], []>} : vector<16x32xf32>, vector<32x64xf32>, vector<16x64xf32> -> vector<16x64xf32>
    %c194 = arith.constant 194 : index
    %c0_52 = arith.constant 0 : index
    %153 = vector.load %arg3[%c194, %c0_52] : memref<440x128xf32, #tpu.memory_space<vmem>>, vector<1x64xf32>
    %154 = vector.broadcast %153 : vector<1x64xf32> to vector<16x64xf32>
    %155 = arith.addf %152, %154 : vector<16x64xf32>
    %156 = vector.extract_strided_slice %155 {offsets = [0, 0], sizes = [16, 32], strides = [1, 1]} : vector<16x64xf32> to vector<16x32xf32>
    %157 = vector.extract_strided_slice %155 {offsets = [0, 32], sizes = [16, 32], strides = [1, 1]} : vector<16x64xf32> to vector<16x32xf32>
    %158 = vector.extract_strided_slice %150 {offsets = [0, 0], sizes = [16, 8], strides = [1, 1]} : vector<16x32xf32> to vector<16x8xf32>
    %159 = vector.shape_cast %158 : vector<16x8xf32> to vector<1x16x8xf32>
    %160 = vector.extract_strided_slice %150 {offsets = [0, 8], sizes = [16, 8], strides = [1, 1]} : vector<16x32xf32> to vector<16x8xf32>
    %161 = vector.shape_cast %160 : vector<16x8xf32> to vector<1x16x8xf32>
    %162 = vector.extract_strided_slice %150 {offsets = [0, 16], sizes = [16, 8], strides = [1, 1]} : vector<16x32xf32> to vector<16x8xf32>
    %163 = vector.shape_cast %162 : vector<16x8xf32> to vector<1x16x8xf32>
    %164 = vector.extract_strided_slice %150 {offsets = [0, 24], sizes = [16, 8], strides = [1, 1]} : vector<16x32xf32> to vector<16x8xf32>
    %165 = vector.shape_cast %164 : vector<16x8xf32> to vector<1x16x8xf32>
    %166 = tpu.concatenate %159, %161, %163, %165 in 0 : vector<1x16x8xf32>, vector<1x16x8xf32>, vector<1x16x8xf32>, vector<1x16x8xf32> -> vector<4x16x8xf32>
    %167 = vector.shape_cast %166 : vector<4x16x8xf32> to vector<8x8x8xf32>
    %168 = vector.extract_strided_slice %156 {offsets = [0, 0], sizes = [16, 8], strides = [1, 1]} : vector<16x32xf32> to vector<16x8xf32>
    %169 = vector.shape_cast %168 : vector<16x8xf32> to vector<1x16x8xf32>
    %170 = vector.extract_strided_slice %156 {offsets = [0, 8], sizes = [16, 8], strides = [1, 1]} : vector<16x32xf32> to vector<16x8xf32>
    %171 = vector.shape_cast %170 : vector<16x8xf32> to vector<1x16x8xf32>
    %172 = vector.extract_strided_slice %156 {offsets = [0, 16], sizes = [16, 8], strides = [1, 1]} : vector<16x32xf32> to vector<16x8xf32>
    %173 = vector.shape_cast %172 : vector<16x8xf32> to vector<1x16x8xf32>
    %174 = vector.extract_strided_slice %156 {offsets = [0, 24], sizes = [16, 8], strides = [1, 1]} : vector<16x32xf32> to vector<16x8xf32>
    %175 = vector.shape_cast %174 : vector<16x8xf32> to vector<1x16x8xf32>
    %176 = tpu.concatenate %169, %171, %173, %175 in 0 : vector<1x16x8xf32>, vector<1x16x8xf32>, vector<1x16x8xf32>, vector<1x16x8xf32> -> vector<4x16x8xf32>
    %177 = vector.shape_cast %176 : vector<4x16x8xf32> to vector<8x8x8xf32>
    %178 = vector.extract_strided_slice %157 {offsets = [0, 0], sizes = [16, 8], strides = [1, 1]} : vector<16x32xf32> to vector<16x8xf32>
    %179 = vector.shape_cast %178 : vector<16x8xf32> to vector<1x16x8xf32>
    %180 = vector.extract_strided_slice %157 {offsets = [0, 8], sizes = [16, 8], strides = [1, 1]} : vector<16x32xf32> to vector<16x8xf32>
    %181 = vector.shape_cast %180 : vector<16x8xf32> to vector<1x16x8xf32>
    %182 = vector.extract_strided_slice %157 {offsets = [0, 16], sizes = [16, 8], strides = [1, 1]} : vector<16x32xf32> to vector<16x8xf32>
    %183 = vector.shape_cast %182 : vector<16x8xf32> to vector<1x16x8xf32>
    %184 = vector.extract_strided_slice %157 {offsets = [0, 24], sizes = [16, 8], strides = [1, 1]} : vector<16x32xf32> to vector<16x8xf32>
    %185 = vector.shape_cast %184 : vector<16x8xf32> to vector<1x16x8xf32>
    %186 = tpu.concatenate %179, %181, %183, %185 in 0 : vector<1x16x8xf32>, vector<1x16x8xf32>, vector<1x16x8xf32>, vector<1x16x8xf32> -> vector<4x16x8xf32>
    %187 = vector.shape_cast %186 : vector<4x16x8xf32> to vector<8x8x8xf32>
    "tpu.trace_start"() <{level = 10 : i32, message = "nqd,nkd->nqk"}> : () -> ()
    %cst_53 = arith.constant dense<0.000000e+00> : vector<8x8x8xf32>
    %188 = tpu.matmul %167, %177, %cst_53 {dimension_numbers = #tpu.dot_dimension_numbers<[2], [2], [1], [1], [0, 0, 0, 1, 1, 1], [0], [0]>} : vector<8x8x8xf32>, vector<8x8x8xf32>, vector<8x8x8xf32> -> vector<8x8x8xf32>
    "tpu.trace_stop"() : () -> ()
    %cst_54 = arith.constant 0.353553385 : f32
    %189 = vector.broadcast %cst_54 : f32 to vector<8x8x8xf32>
    %190 = arith.mulf %188, %189 : vector<8x8x8xf32>
    %191 = vector.shape_cast %190 : vector<8x8x8xf32> to vector<4x2x8x8xf32>
    %192 = vector.shape_cast %145 : vector<2x8x8xf32> to vector<1x2x8x8xf32>
    %193 = vector.broadcast %192 : vector<1x2x8x8xf32> to vector<4x2x8x8xf32>
    %194 = arith.addf %191, %193 : vector<4x2x8x8xf32>
    %195 = vector.shape_cast %194 : vector<4x2x8x8xf32> to vector<8x8x8xf32>
    %cst_55 = arith.constant dense<0xFF800000> : vector<8x8xf32>
    %196 = vector.multi_reduction <maximumf>, %195, %cst_55 [2] : vector<8x8x8xf32> to vector<8x8xf32>
    %197 = vector.shape_cast %196 : vector<8x8xf32> to vector<8x8x1xf32>
    %198 = vector.broadcast %197 : vector<8x8x1xf32> to vector<8x8x8xf32>
    %199 = arith.subf %195, %198 : vector<8x8x8xf32>
    %200 = math.exp %199 : vector<8x8x8xf32>
    %cst_56 = arith.constant dense<0.000000e+00> : vector<8x8xf32>
    %201 = vector.multi_reduction <add>, %200, %cst_56 [2] : vector<8x8x8xf32> to vector<8x8xf32>
    %202 = vector.shape_cast %201 : vector<8x8xf32> to vector<8x8x1xf32>
    %203 = tpu.reciprocal %202 {approx = true} : vector<8x8x1xf32> -> vector<8x8x1xf32>
    %204 = vector.broadcast %203 : vector<8x8x1xf32> to vector<8x8x8xf32>
    %205 = arith.mulf %200, %204 : vector<8x8x8xf32>
    "tpu.trace_start"() <{level = 10 : i32, message = "nqk,nkd->nqd"}> : () -> ()
    %cst_57 = arith.constant dense<0.000000e+00> : vector<8x8x8xf32>
    %206 = tpu.matmul %205, %187, %cst_57 {dimension_numbers = #tpu.dot_dimension_numbers<[2], [1], [1], [2], [0, 0, 0, 1, 1, 2], [0], [0]>} : vector<8x8x8xf32>, vector<8x8x8xf32>, vector<8x8x8xf32> -> vector<8x8x8xf32>
    "tpu.trace_stop"() : () -> ()
    %207 = vector.shape_cast %206 : vector<8x8x8xf32> to vector<4x16x8xf32>
    %208 = vector.extract_strided_slice %207 {offsets = [0, 0, 0], sizes = [1, 16, 8], strides = [1, 1, 1]} : vector<4x16x8xf32> to vector<1x16x8xf32>
    %209 = vector.shape_cast %208 : vector<1x16x8xf32> to vector<16x8xf32>
    %210 = vector.extract_strided_slice %207 {offsets = [1, 0, 0], sizes = [1, 16, 8], strides = [1, 1, 1]} : vector<4x16x8xf32> to vector<1x16x8xf32>
    %211 = vector.shape_cast %210 : vector<1x16x8xf32> to vector<16x8xf32>
    %212 = vector.extract_strided_slice %207 {offsets = [2, 0, 0], sizes = [1, 16, 8], strides = [1, 1, 1]} : vector<4x16x8xf32> to vector<1x16x8xf32>
    %213 = vector.shape_cast %212 : vector<1x16x8xf32> to vector<16x8xf32>
    %214 = vector.extract_strided_slice %207 {offsets = [3, 0, 0], sizes = [1, 16, 8], strides = [1, 1, 1]} : vector<4x16x8xf32> to vector<1x16x8xf32>
    %215 = vector.shape_cast %214 : vector<1x16x8xf32> to vector<16x8xf32>
    %216 = tpu.concatenate %209, %211, %213, %215 in 1 : vector<16x8xf32>, vector<16x8xf32>, vector<16x8xf32>, vector<16x8xf32> -> vector<16x32xf32>
    %c32_58 = arith.constant 32 : index
    %c96_59 = arith.constant 96 : index
    %217 = vector.load %arg3[%c32_58, %c96_59] : memref<440x128xf32, #tpu.memory_space<vmem>>, vector<32x32xf32>
    %cst_60 = arith.constant dense<0.000000e+00> : vector<16x32xf32>
    %218 = tpu.matmul %216, %217, %cst_60 {dimension_numbers = #tpu.dot_dimension_numbers<[1], [0], [0], [1], [0, 0, 1, 1], [], []>} : vector<16x32xf32>, vector<32x32xf32>, vector<16x32xf32> -> vector<16x32xf32>
    %c197_61 = arith.constant 197 : index
    %c64_62 = arith.constant 64 : index
    %219 = vector.load %arg3[%c197_61, %c64_62] : memref<440x128xf32, #tpu.memory_space<vmem>>, vector<1x32xf32>
    %220 = vector.broadcast %219 : vector<1x32xf32> to vector<16x32xf32>
    %221 = arith.addf %218, %220 : vector<16x32xf32>
    %222 = arith.addf %221, %221 : vector<16x32xf32>
    %c197_63 = arith.constant 197 : index
    %c96_64 = arith.constant 96 : index
    %223 = vector.load %arg3[%c197_63, %c96_64] : memref<440x128xf32, #tpu.memory_space<vmem>>, vector<1x32xf32>
    %c198 = arith.constant 198 : index
    %c0_65 = arith.constant 0 : index
    %224 = vector.load %arg3[%c198, %c0_65] : memref<440x128xf32, #tpu.memory_space<vmem>>, vector<1x32xf32>
    %cst_66 = arith.constant dense<0.000000e+00> : vector<16xf32>
    %225 = vector.multi_reduction <add>, %222, %cst_66 [1] : vector<16x32xf32> to vector<16xf32>
    %226 = vector.shape_cast %225 : vector<16xf32> to vector<16x1xf32>
    %cst_67 = arith.constant 3.200000e+01 : f32
    %227 = vector.broadcast %cst_67 : f32 to vector<16x1xf32>
    %228 = arith.divf %226, %227 : vector<16x1xf32>
    %229 = vector.broadcast %228 : vector<16x1xf32> to vector<16x32xf32>
    %230 = arith.subf %222, %229 : vector<16x32xf32>
    %231 = arith.mulf %230, %230 : vector<16x32xf32>
    %cst_68 = arith.constant dense<0.000000e+00> : vector<16xf32>
    %232 = vector.multi_reduction <add>, %231, %cst_68 [1] : vector<16x32xf32> to vector<16xf32>
    %233 = vector.shape_cast %232 : vector<16xf32> to vector<16x1xf32>
    %cst_69 = arith.constant 3.200000e+01 : f32
    %234 = vector.broadcast %cst_69 : f32 to vector<16x1xf32>
    %235 = arith.divf %233, %234 : vector<16x1xf32>
    %cst_70 = arith.constant 9.99999974E-6 : f32
    %236 = vector.broadcast %cst_70 : f32 to vector<16x1xf32>
    %237 = arith.addf %235, %236 : vector<16x1xf32>
    %238 = math.rsqrt %237 : vector<16x1xf32>
    %239 = vector.broadcast %238 : vector<16x1xf32> to vector<16x32xf32>
    %240 = arith.mulf %230, %239 : vector<16x32xf32>
    %241 = vector.broadcast %223 : vector<1x32xf32> to vector<16x32xf32>
    %242 = arith.mulf %240, %241 : vector<16x32xf32>
    %243 = vector.broadcast %224 : vector<1x32xf32> to vector<16x32xf32>
    %244 = arith.addf %242, %243 : vector<16x32xf32>
    %c64_71 = arith.constant 64 : index
    %c64_72 = arith.constant 64 : index
    %245 = vector.load %arg3[%c64_71, %c64_72] : memref<440x128xf32, #tpu.memory_space<vmem>>, vector<32x64xf32>
    %cst_73 = arith.constant dense<0.000000e+00> : vector<16x64xf32>
    %246 = tpu.matmul %244, %245, %cst_73 {dimension_numbers = #tpu.dot_dimension_numbers<[1], [0], [0], [1], [0, 0, 1, 1], [], []>} : vector<16x32xf32>, vector<32x64xf32>, vector<16x64xf32> -> vector<16x64xf32>
    %c193_74 = arith.constant 193 : index
    %c64_75 = arith.constant 64 : index
    %247 = vector.load %arg3[%c193_74, %c64_75] : memref<440x128xf32, #tpu.memory_space<vmem>>, vector<1x64xf32>
    %248 = vector.broadcast %247 : vector<1x64xf32> to vector<16x64xf32>
    %249 = arith.addf %246, %248 : vector<16x64xf32>
    %cst_76 = arith.constant 0.000000e+00 : f32
    %250 = vector.broadcast %cst_76 : f32 to vector<16x64xf32>
    %251 = arith.maximumf %249, %250 : vector<16x64xf32>
    %c128_77 = arith.constant 128 : index
    %c32_78 = arith.constant 32 : index
    %252 = vector.load %arg3[%c128_77, %c32_78] : memref<440x128xf32, #tpu.memory_space<vmem>>, vector<64x32xf32>
    %cst_79 = arith.constant dense<0.000000e+00> : vector<16x32xf32>
    %253 = tpu.matmul %251, %252, %cst_79 {dimension_numbers = #tpu.dot_dimension_numbers<[1], [0], [0], [1], [0, 0, 1, 1], [], []>} : vector<16x64xf32>, vector<64x32xf32>, vector<16x32xf32> -> vector<16x32xf32>
    %c198_80 = arith.constant 198 : index
    %c32_81 = arith.constant 32 : index
    %254 = vector.load %arg3[%c198_80, %c32_81] : memref<440x128xf32, #tpu.memory_space<vmem>>, vector<1x32xf32>
    %255 = vector.broadcast %254 : vector<1x32xf32> to vector<16x32xf32>
    %256 = arith.addf %253, %255 : vector<16x32xf32>
    %257 = arith.addf %244, %256 : vector<16x32xf32>
    %c198_82 = arith.constant 198 : index
    %c64_83 = arith.constant 64 : index
    %258 = vector.load %arg3[%c198_82, %c64_83] : memref<440x128xf32, #tpu.memory_space<vmem>>, vector<1x32xf32>
    %c198_84 = arith.constant 198 : index
    %c96_85 = arith.constant 96 : index
    %259 = vector.load %arg3[%c198_84, %c96_85] : memref<440x128xf32, #tpu.memory_space<vmem>>, vector<1x32xf32>
    %cst_86 = arith.constant dense<0.000000e+00> : vector<16xf32>
    %260 = vector.multi_reduction <add>, %257, %cst_86 [1] : vector<16x32xf32> to vector<16xf32>
    %261 = vector.shape_cast %260 : vector<16xf32> to vector<16x1xf32>
    %cst_87 = arith.constant 3.200000e+01 : f32
    %262 = vector.broadcast %cst_87 : f32 to vector<16x1xf32>
    %263 = arith.divf %261, %262 : vector<16x1xf32>
    %264 = vector.broadcast %263 : vector<16x1xf32> to vector<16x32xf32>
    %265 = arith.subf %257, %264 : vector<16x32xf32>
    %266 = arith.mulf %265, %265 : vector<16x32xf32>
    %cst_88 = arith.constant dense<0.000000e+00> : vector<16xf32>
    %267 = vector.multi_reduction <add>, %266, %cst_88 [1] : vector<16x32xf32> to vector<16xf32>
    %268 = vector.shape_cast %267 : vector<16xf32> to vector<16x1xf32>
    %cst_89 = arith.constant 3.200000e+01 : f32
    %269 = vector.broadcast %cst_89 : f32 to vector<16x1xf32>
    %270 = arith.divf %268, %269 : vector<16x1xf32>
    %cst_90 = arith.constant 9.99999974E-6 : f32
    %271 = vector.broadcast %cst_90 : f32 to vector<16x1xf32>
    %272 = arith.addf %270, %271 : vector<16x1xf32>
    %273 = math.rsqrt %272 : vector<16x1xf32>
    %274 = vector.broadcast %273 : vector<16x1xf32> to vector<16x32xf32>
    %275 = arith.mulf %265, %274 : vector<16x32xf32>
    %276 = vector.broadcast %258 : vector<1x32xf32> to vector<16x32xf32>
    %277 = arith.mulf %275, %276 : vector<16x32xf32>
    %278 = vector.broadcast %259 : vector<1x32xf32> to vector<16x32xf32>
    %279 = arith.addf %277, %278 : vector<16x32xf32>
    %c96_91 = arith.constant 96 : index
    %c0_92 = arith.constant 0 : index
    %280 = vector.load %arg3[%c96_91, %c0_92] : memref<440x128xf32, #tpu.memory_space<vmem>>, vector<32x128xf32>
    %cst_93 = arith.constant dense<0.000000e+00> : vector<16x128xf32>
    %281 = tpu.matmul %279, %280, %cst_93 {dimension_numbers = #tpu.dot_dimension_numbers<[1], [0], [0], [1], [0, 0, 1, 1], [], []>} : vector<16x32xf32>, vector<32x128xf32>, vector<16x128xf32> -> vector<16x128xf32>
    %c195 = arith.constant 195 : index
    %c0_94 = arith.constant 0 : index
    %282 = vector.load %arg3[%c195, %c0_94] : memref<440x128xf32, #tpu.memory_space<vmem>>, vector<1x128xf32>
    %283 = vector.broadcast %282 : vector<1x128xf32> to vector<16x128xf32>
    %284 = arith.addf %281, %283 : vector<16x128xf32>
    %cst_95 = arith.constant dense<0xFF800000> : vector<16xf32>
    %285 = vector.multi_reduction <maximumf>, %284, %cst_95 [1] : vector<16x128xf32> to vector<16xf32>
    %286 = vector.shape_cast %285 : vector<16xf32> to vector<16x1xf32>
    %287 = vector.broadcast %286 : vector<16x1xf32> to vector<16x128xf32>
    %288 = arith.subf %284, %287 : vector<16x128xf32>
    %289 = math.exp %288 : vector<16x128xf32>
    %cst_96 = arith.constant dense<0.000000e+00> : vector<16xf32>
    %290 = vector.multi_reduction <add>, %289, %cst_96 [1] : vector<16x128xf32> to vector<16xf32>
    %291 = vector.shape_cast %290 : vector<16xf32> to vector<16x1xf32>
    %292 = math.log %291 : vector<16x1xf32>
    %293 = arith.addf %286, %292 : vector<16x1xf32>
    %294 = vector.broadcast %293 : vector<16x1xf32> to vector<16x128xf32>
    %295 = arith.subf %284, %294 : vector<16x128xf32>
    %c0_97 = arith.constant 0 : index
    %c0_98 = arith.constant 0 : index
    %296 = vector.load %arg4[%c0_97, %c0_98] : memref<16x128xf32, #tpu.memory_space<vmem>>, vector<16x128xf32>
    tpu.vector_store %arg4[%c0_97, %c0_98], %295 {strides = array<i32>} : memref<16x128xf32, #tpu.memory_space<vmem>>, vector<16x128xf32>,
    return
  }
  func.func @transform_0(%arg0: i32) -> (i32, i32) {
    %c0_i32 = arith.constant 0 : i32
    %c0_i32_0 = arith.constant 0 : i32
    %c0_i32_1 = arith.constant 0 : i32
    return %c0_i32, %c0_i32_0 : i32, i32
  }
  func.func @transform_1(%arg0: i32) -> (i32, i32, i32) {
    %c0_i32 = arith.constant 0 : i32
    %c0_i32_0 = arith.constant 0 : i32
    %c0_i32_1 = arith.constant 0 : i32
    %c0_i32_2 = arith.constant 0 : i32
    return %c0_i32, %c0_i32_0, %c0_i32_1 : i32, i32, i32
  }
  func.func @transform_2(%arg0: i32) -> (i32, i32) {
    %c0_i32 = arith.constant 0 : i32
    %c0_i32_0 = arith.constant 0 : i32
    %c0_i32_1 = arith.constant 0 : i32
    return %c0_i32, %c0_i32_0 : i32, i32
  }
  func.func @transform_3(%arg0: i32) -> (i32, i32) {
    %c0_i32 = arith.constant 0 : i32
    %c0_i32_0 = arith.constant 0 : i32
    %c0_i32_1 = arith.constant 0 : i32
    return %c0_i32, %c0_i32_0 : i32, i32
  }
}

</mosaic_0001>

<llo_original>
// kernel: tpu_custom_call.1
$region0: #{tpu_custom_call.1}
  #allocation0 [shape = 'u32[]', space=smem, size = 0x4, offset = 0x4, fixed_abs, tag = 'smem constant byte address 0x4 - core index']
  #allocation1 [shape = 'u32[72,128]{1,0:T(1,128)}', space=vmem, size = 0x9000, scoped, tag = 'internal scratch']
  %s0 = inlined_call_operand.vmem [shape: s32[32,2], index: 0, kind: input, shape index: {}]
  %s1 = inlined_call_operand.vmem [shape: f32[2,16,8], index: 1, kind: input, shape index: {}]
  %s2 = inlined_call_operand.hbm [shape: f32[440,128], index: 2, kind: input, shape index: {}]
  %s3 = inlined_call_operand.hbm [shape: f32[16,128], index: 3, kind: output, shape index: {}]
  %s4 = sld [smem:[#allocation0]]
  $region26: #{tpu_custom_call.1} parent=0
    _
  %s6 = ssub.s32 1, %s4
  %s7 = scalar_select 0, %s6, %s4
  $region1: #{tpu_custom_call.1} parent=0
    #allocation2 [shape = 'u8[225280]{0}', space=vmem, size = 0x37000, scoped, tag = 'input window, operand 2, single buffered']
    #allocation3 [shape = 's32[1]{0}', space=sflag, size = 0x4, scoped, tag = 'scoped memory for tpu_custom_call.1']
    #allocation4 [shape = 's32[1]{0}', space=sflag, size = 0x4, scoped, tag = 'scoped memory for tpu_custom_call.1']
    #allocation5 [shape = 'u8[8192]{0}', space=vmem, size = 0x2000, scoped, tag = 'output window, operand 0, single buffered']
    %8 = vsyncpa [#allocation3], 0
    %9 = vsyncpa [#allocation4], 0
    // Predicated region
    $region2: #{tpu_custom_call.1} parent=1 // pred_check
      _
    $region3: #{tpu_custom_call.1} parent=1 // pred_check_branch
      %11 = sbr.rel (0) target = $region5
    $region4: #{tpu_custom_call.1} parent=1 // pred_region
      _
    $region5: #{tpu_custom_call.1} parent=1 // pred_fallthru
      _
    // Predicated region
    $region6: #{tpu_custom_call.1} parent=1 // pred_check
      _
    $region7: #{tpu_custom_call.1} parent=1 // pred_check_branch
      %13 = sbr.rel (0) target = $region9
    $region8: #{tpu_custom_call.1} parent=1 // pred_region
      _
    $region9: #{tpu_custom_call.1} parent=1 // pred_fallthru
      _
    // Predicated region
    $region10: #{tpu_custom_call.1} parent=1 // pred_check
      _
    $region11: #{tpu_custom_call.1} parent=1 // pred_check_branch
      %15 = sbr.rel (0) target = $region13
    $region12: #{tpu_custom_call.1} parent=1 // pred_region
      %17 = vsyncadd [#allocation3], 0
      %s18 = sshll.u32 %s2, 4
      %s19 = int_to_ptr.hbm [resolvable:$true] %s18
      %s20 = sshll.u32 [#allocation2], 4
      %s21 = int_to_ptr.vmem [resolvable:$true] %s20
      %26 = dma.hbm_to_vmem [thread:$0]  %s19, 7040, %s21, [#allocation3], 128, 128, 8
    $region13: #{tpu_custom_call.1} parent=1 // pred_fallthru
      _
    // Predicated region
    $region14: #{tpu_custom_call.1} parent=1 // pred_check
      _
    $region15: #{tpu_custom_call.1} parent=1 // pred_check_branch
      %28 = sbr.rel (0) target = $region17
    $region16: #{tpu_custom_call.1} parent=1 // pred_region
      %30 = dma.done [#allocation3], 7040
    $region17: #{tpu_custom_call.1} parent=1 // pred_fallthru
      _
    %v31 = vld [vmem:[#allocation2 + $0xc8] sm:$0xff]
    %v32 = vld [vmem:[#allocation2 + $0xd0] sm:$0xff]
    %v33 = vld [vmem:[#allocation2 + $0xd8] sm:$0xff]
    %v34 = vld [vmem:[#allocation2 + $0xe0] sm:$0xff]
    %v35 = vld [vmem:[#allocation2 + $0xe8] sm:$0xff]
    %v36 = vld [vmem:[#allocation2 + $0xf0] sm:$0xff]
    %v37 = vld [vmem:[#allocation2 + $0xf8] sm:$0xff]
    %v38 = vld [vmem:[#allocation2 + $0x100] sm:$0xff]
    %v39 = vld [vmem:[#allocation2 + $0x108] sm:$0xff]
    %v40 = vld [vmem:[#allocation2 + $0x110] sm:$0xff]
    %v41 = vld [vmem:[#allocation2 + $0x118] sm:$0xff]
    %v42 = vld [vmem:[#allocation2 + $0x120] sm:$0xff]
    %v43 = vld [vmem:[#allocation2 + $0x128] sm:$0xff]
    %v44 = vld [vmem:[#allocation2 + $0x130] sm:$0xff]
    %v45 = vld [vmem:[#allocation2 + $0x138] sm:$0xff]
    %v46 = vld [vmem:[#allocation2 + $0x140] sm:$0xff]
    %v47 = vld [vmem:[#allocation2 + $0x148] sm:$0xff]
    %v48 = vld [vmem:[#allocation2 + $0x150] sm:$0xff]
    %v49 = vld [vmem:[#allocation2 + $0x158] sm:$0xff]
    %v50 = vld [vmem:[#allocation2 + $0x160] sm:$0xff]
    %v51 = vld [vmem:[#allocation2 + $0x168] sm:$0xff]
    %v52 = vld [vmem:[#allocation2 + $0x170] sm:$0xff]
    %v53 = vld [vmem:[#allocation2 + $0x178] sm:$0xff]
    %v54 = vld [vmem:[#allocation2 + $0x180] sm:$0xff]
    %v55 = vld [vmem:[#allocation2 + $0x188] sm:$0xff]
    %v56 = vld [vmem:[#allocation2 + $0x190] sm:$0xff]
    %v57 = vld [vmem:[#allocation2 + $0x198] sm:$0xff]
    %v58 = vld [vmem:[#allocation2 + $0x1a0] sm:$0xff]
    %v59 = vld [vmem:[#allocation2 + $0x1a8] sm:$0xff]
    %v60 = vld [vmem:[#allocation2 + $0x1b0] sm:$0xff]
    %v61 = vld [vmem:[%s0] sm:$0xff]
    %v62 = vld [vmem:[%s0 + $0x8] sm:$0xff]
    %v63 = vld [vmem:[%s0 + $0x10] sm:$0xff]
    %v64 = vld [vmem:[%s0 + $0x18] sm:$0xff]
    %v65 = vlaneseq
    %v66 = vand.u32 %v65, 127
    %v67 = vadd.s32 %v66, 128
    %68 = vset.pattern.permute.xlu0 0
    %69 = vperm.xlu0 %68, %v61
    %v70 = vpop.permute.xlu0 %69
    %71 = vset.pattern.permute.xlu0 0
    %72 = vperm.xlu0 %71, %v62
    %v73 = vpop.permute.xlu0 %72
    %74 = vset.pattern.permute.xlu0 0
    %75 = vperm.xlu0 %74, %v63
    %v76 = vpop.permute.xlu0 %75
    %77 = vset.pattern.permute.xlu0 0
    %78 = vperm.xlu0 %77, %v64
    %v79 = vpop.permute.xlu0 %78
    %vm80 = vcmp.eq.s32.totalorder %v66, %v70
    %vm81 = vcmp.eq.s32.totalorder %v67, %v70
    %vm82 = vcmp.eq.s32.totalorder %v66, %v73
    %vm83 = vcmp.eq.s32.totalorder %v67, %v73
    %vm84 = vcmp.eq.s32.totalorder %v66, %v76
    %vm85 = vcmp.eq.s32.totalorder %v67, %v76
    %vm86 = vcmp.eq.s32.totalorder %v66, %v79
    %vm87 = vcmp.eq.s32.totalorder %v67, %v79
    %88 = vset.pattern.permute.xlu0 1
    %89 = vperm.xlu0 %88, %v61
    %v90 = vpop.permute.xlu0 %89
    %91 = vset.pattern.permute.xlu0 1
    %92 = vperm.xlu0 %91, %v62
    %v93 = vpop.permute.xlu0 %92
    %94 = vset.pattern.permute.xlu0 1
    %95 = vperm.xlu0 %94, %v63
    %v96 = vpop.permute.xlu0 %95
    %97 = vset.pattern.permute.xlu0 1
    %98 = vperm.xlu0 %97, %v64
    %v99 = vpop.permute.xlu0 %98
    %vm100 = vcmp.eq.s32.totalorder %v66, %v90
    %vm101 = vcmp.eq.s32.totalorder %v67, %v90
    %vm102 = vcmp.eq.s32.totalorder %v66, %v93
    %vm103 = vcmp.eq.s32.totalorder %v67, %v93
    %vm104 = vcmp.eq.s32.totalorder %v66, %v96
    %vm105 = vcmp.eq.s32.totalorder %v67, %v96
    %vm106 = vcmp.eq.s32.totalorder %v66, %v99
    %vm107 = vcmp.eq.s32.totalorder %v67, %v99
    %vm108 = vmor %vm80, %vm100
    %vm109 = vmor %vm81, %vm101
    %vm110 = vmor %vm82, %vm102
    %vm111 = vmor %vm83, %vm103
    %vm112 = vmor %vm84, %vm104
    %vm113 = vmor %vm85, %vm105
    %vm114 = vmor %vm86, %vm106
    %vm115 = vmor %vm87, %vm107
    %v116 = vsel %vm108, 1, 0
    %v117 = vsel %vm109, 1, 0
    %v118 = vsel %vm110, 1, 0
    %v119 = vsel %vm111, 1, 0
    %v120 = vsel %vm112, 1, 0
    %v121 = vsel %vm113, 1, 0
    %v122 = vsel %vm114, 1, 0
    %v123 = vsel %vm115, 1, 0
    %v124 = vcvt.s32.f32 %v116
    %v125 = vcvt.s32.f32 %v117
    %v126 = vcvt.s32.f32 %v118
    %v127 = vcvt.s32.f32 %v119
    %v128 = vcvt.s32.f32 %v120
    %v129 = vcvt.s32.f32 %v121
    %v130 = vcvt.s32.f32 %v122
    %v131 = vcvt.s32.f32 %v123
    %vm132 = vcmask 916480
    %v134 = vsel %vm132, %v125, 0
    %v137 = vsel %vm132, %v127, 0
    %v140 = vsel %vm132, %v129, 0
    %v143 = vsel %vm132, %v131, 0
    %145 = vmatpush.msra.mxu0 %v46
    %146 = vmatpush.msra.mxu0 %v45
    %147 = vmatpush.msra.mxu0 %v44
    %148 = vmatpush.msra.mxu0 %v43
    %149 = vmatpush.msra.mxu0 %v42
    %150 = vmatpush.msra.mxu0 %v41
    %151 = vmatpush.msra.mxu0 %v40
    %152 = vmatpush.msra.mxu0 %v39
    %153 = vmatpush.msra.mxu0 %v38
    %154 = vmatpush.msra.mxu0 %v37
    %155 = vmatpush.msra.mxu0 %v36
    %156 = vmatpush.msra.mxu0 %v35
    %157 = vmatpush.msra.mxu0 %v34
    %158 = vmatpush.msra.mxu0 %v33
    %159 = vmatpush.msra.mxu0 %v32
    %160 = vmatpush.msra.mxu0 %v31
    %161 = vmatmul.f32.gmra.mxu0 %v124
    %v162 = vpop.f32.mrf.mxu0
    %v163 = vadd.f32 0.0, %v162
    %164 = vmatmul.f32.gmra.mxu0 %v126
    %v165 = vpop.f32.mrf.mxu0
    %v166 = vadd.f32 0.0, %v165
    %167 = vmatmul.f32.gmra.mxu0 %v128
    %v168 = vpop.f32.mrf.mxu0
    %v169 = vadd.f32 0.0, %v168
    %170 = vmatmul.f32.gmra.mxu0 %v130
    %v171 = vpop.f32.mrf.mxu0
    %v172 = vadd.f32 0.0, %v171
    %173 = vdwg.mxu0
    %174 = vmatpush.msra.mxu0 0.0
    %175 = vmatpush.msra.mxu0 0.0
    %176 = vmatpush.msra.mxu0 %v60
    %177 = vmatpush.msra.mxu0 %v59
    %178 = vmatpush.msra.mxu0 %v58
    %179 = vmatpush.msra.mxu0 %v57
    %180 = vmatpush.msra.mxu0 %v56
    %181 = vmatpush.msra.mxu0 %v55
    %182 = vmatpush.msra.mxu0 %v54
    %183 = vmatpush.msra.mxu0 %v53
    %184 = vmatpush.msra.mxu0 %v52
    %185 = vmatpush.msra.mxu0 %v51
    %186 = vmatpush.msra.mxu0 %v50
    %187 = vmatpush.msra.mxu0 %v49
    %188 = vmatpush.msra.mxu0 %v48
    %189 = vmatpush.msra.mxu0 %v47
    %190 = vmatmul.f32.gmra.mxu0 %v134
    %v191 = vpop.f32.mrf.mxu0
    %v192 = vadd.f32 %v163, %v191
    %193 = vmatmul.f32.gmra.mxu0 %v137
    %v194 = vpop.f32.mrf.mxu0
    %v195 = vadd.f32 %v166, %v194
    %196 = vmatmul.f32.gmra.mxu0 %v140
    %v197 = vpop.f32.mrf.mxu0
    %v198 = vadd.f32 %v169, %v197
    %199 = vmatmul.f32.gmra.mxu0 %v143
    %v200 = vpop.f32.mrf.mxu0
    %v201 = vadd.f32 %v172, %v200
    %202 = vdwg.mxu0
    %v203 = vld [vmem:[%s1] sm:$0xff]
    %v204 = vld [vmem:[%s1 + $0x10] sm:$0xff]
    %v205 = vld [vmem:[#allocation2] sm:$0xff]
    %v206 = vld [vmem:[#allocation2 + $0x8] sm:$0xff]
    %v207 = vld [vmem:[#allocation2 + $0x10] sm:$0xff]
    %v208 = vld [vmem:[#allocation2 + $0x18] sm:$0xff]
    %v209 = vld [vmem:[#allocation2 + $0xc0] sm:$0x1]
    %v210 = vperm.slane %v209, 0
    %vm211 = vcmask 261120
    %v213 = vsel %vm211, %v192, 0
    %v216 = vsel %vm211, %v195, 0
    %218 = vmatpush.msra.mxu0 0.0
    %219 = vmatpush.msra.mxu0 0.0
    %220 = vmatpush.msra.mxu0 0.0
    %221 = vmatpush.msra.mxu0 0.0
    %222 = vmatpush.msra.mxu0 0.0
    %223 = vmatpush.msra.mxu0 0.0
    %224 = vmatpush.msra.mxu0 0.0
    %225 = vmatpush.msra.mxu0 0.0
    %226 = vmatpush.msra.mxu0 0.0
    %227 = vmatpush.msra.mxu0 0.0
    %228 = vmatpush.msra.mxu0 0.0
    %229 = vmatpush.msra.mxu0 0.0
    %230 = vmatpush.msra.mxu0 %v208
    %231 = vmatpush.msra.mxu0 %v207
    %232 = vmatpush.msra.mxu0 %v206
    %233 = vmatpush.msra.mxu0 %v205
    %234 = vmatmul.f32.gmra.mxu0 %v213
    %v235 = vpop.f32.mrf.mxu0
    %v236 = vadd.f32 %v210, %v235
    %237 = vmatmul.f32.gmra.mxu0 %v216
    %v238 = vpop.f32.mrf.mxu0
    %v239 = vadd.f32 %v210, %v238
    %240 = vdwg.mxu0
    %243 = vrot.lane.b32.xlu0 %v236, 120
    %v244 = vpop.permute.xlu0 %243
    %245 = vrot.lane.b32.xlu0 %v239, 120
    %v246 = vpop.permute.xlu0 %245
    %247 = vrot.lane.b32.xlu0 %v236, 112
    %v248 = vpop.permute.xlu0 %247
    %249 = vrot.lane.b32.xlu0 %v239, 112
    %v250 = vpop.permute.xlu0 %249
    %251 = vrot.lane.b32.xlu0 %v236, 104
    %v252 = vpop.permute.xlu0 %251
    %253 = vrot.lane.b32.xlu0 %v239, 104
    %v254 = vpop.permute.xlu0 %253
    %255 = vrot.lane.b32.xlu0 %v236, 96
    %v256 = vpop.permute.xlu0 %255
    %vm257 = vcmask 64512
    %v258 = vsel %vm257, %v236, 0
    %v260 = vsel %vm257, %v256, 0
    %262 = vmatpush.xpose.msra.mxu0 0.0
    %263 = vmatpush.xpose.msra.mxu0 0.0
    %264 = vmatpush.xpose.msra.mxu0 0.0
    %265 = vmatpush.xpose.msra.mxu0 0.0
    %266 = vmatpush.xpose.msra.mxu0 0.0
    %267 = vmatpush.xpose.msra.mxu0 0.0
    %268 = vmatpush.xpose.msra.mxu0 0.0
    %269 = vmatpush.xpose.msra.mxu0 0.0
    %270 = vmatpush.xpose.msra.mxu0 0.0
    %271 = vmatpush.xpose.msra.mxu0 0.0
    %272 = vmatpush.xpose.msra.mxu0 0.0
    %273 = vmatpush.xpose.msra.mxu0 0.0
    %274 = vmatpush.xpose.msra.mxu0 0.0
    %275 = vmatpush.xpose.msra.mxu0 0.0
    %276 = vmatpush.xpose.msra.mxu0 0.0
    %277 = vmatpush.xpose.msra.mxu0 %v260
    %278 = vmatmul.f32.gmra.mxu0 %v258
    %v279 = vpop.f32.mrf.mxu0
    %v280 = vadd.f32 0.0, %v279
    %281 = vdwg.mxu0
    %282 = vrot.lane.b32.xlu0 %v239, 96
    %v283 = vpop.permute.xlu0 %282
    %v284 = vsel %vm257, %v239, 0
    %v286 = vsel %vm257, %v283, 0
    %288 = vmatpush.xpose.msra.mxu0 0.0
    %289 = vmatpush.xpose.msra.mxu0 0.0
    %290 = vmatpush.xpose.msra.mxu0 0.0
    %291 = vmatpush.xpose.msra.mxu0 0.0
    %292 = vmatpush.xpose.msra.mxu0 0.0
    %293 = vmatpush.xpose.msra.mxu0 0.0
    %294 = vmatpush.xpose.msra.mxu0 0.0
    %295 = vmatpush.xpose.msra.mxu0 0.0
    %296 = vmatpush.xpose.msra.mxu0 0.0
    %297 = vmatpush.xpose.msra.mxu0 0.0
    %298 = vmatpush.xpose.msra.mxu0 0.0
    %299 = vmatpush.xpose.msra.mxu0 0.0
    %300 = vmatpush.xpose.msra.mxu0 0.0
    %301 = vmatpush.xpose.msra.mxu0 0.0
    %302 = vmatpush.xpose.msra.mxu0 0.0
    %303 = vmatpush.xpose.msra.mxu0 %v286
    %304 = vmatmul.f32.gmra.mxu0 %v284
    %v305 = vpop.f32.mrf.mxu0
    %v306 = vadd.f32 0.0, %v305
    %307 = vdwg.mxu0
    %308 = vrot.lane.b32.xlu0 %v244, 96
    %v309 = vpop.permute.xlu0 %308
    %v310 = vsel %vm257, %v244, 0
    %v312 = vsel %vm257, %v309, 0
    %314 = vmatpush.xpose.msra.mxu0 0.0
    %315 = vmatpush.xpose.msra.mxu0 0.0
    %316 = vmatpush.xpose.msra.mxu0 0.0
    %317 = vmatpush.xpose.msra.mxu0 0.0
    %318 = vmatpush.xpose.msra.mxu0 0.0
    %319 = vmatpush.xpose.msra.mxu0 0.0
    %320 = vmatpush.xpose.msra.mxu0 0.0
    %321 = vmatpush.xpose.msra.mxu0 0.0
    %322 = vmatpush.xpose.msra.mxu0 0.0
    %323 = vmatpush.xpose.msra.mxu0 0.0
    %324 = vmatpush.xpose.msra.mxu0 0.0
    %325 = vmatpush.xpose.msra.mxu0 0.0
    %326 = vmatpush.xpose.msra.mxu0 0.0
    %327 = vmatpush.xpose.msra.mxu0 0.0
    %328 = vmatpush.xpose.msra.mxu0 0.0
    %329 = vmatpush.xpose.msra.mxu0 %v312
    %330 = vmatmul.f32.gmra.mxu0 %v310
    %v331 = vpop.f32.mrf.mxu0
    %v332 = vadd.f32 0.0, %v331
    %333 = vdwg.mxu0
    %334 = vrot.lane.b32.xlu0 %v246, 96
    %v335 = vpop.permute.xlu0 %334
    %v336 = vsel %vm257, %v246, 0
    %v338 = vsel %vm257, %v335, 0
    %340 = vmatpush.xpose.msra.mxu0 0.0
    %341 = vmatpush.xpose.msra.mxu0 0.0
    %342 = vmatpush.xpose.msra.mxu0 0.0
    %343 = vmatpush.xpose.msra.mxu0 0.0
    %344 = vmatpush.xpose.msra.mxu0 0.0
    %345 = vmatpush.xpose.msra.mxu0 0.0
    %346 = vmatpush.xpose.msra.mxu0 0.0
    %347 = vmatpush.xpose.msra.mxu0 0.0
    %348 = vmatpush.xpose.msra.mxu0 0.0
    %349 = vmatpush.xpose.msra.mxu0 0.0
    %350 = vmatpush.xpose.msra.mxu0 0.0
    %351 = vmatpush.xpose.msra.mxu0 0.0
    %352 = vmatpush.xpose.msra.mxu0 0.0
    %353 = vmatpush.xpose.msra.mxu0 0.0
    %354 = vmatpush.xpose.msra.mxu0 0.0
    %355 = vmatpush.xpose.msra.mxu0 %v338
    %356 = vmatmul.f32.gmra.mxu0 %v336
    %v357 = vpop.f32.mrf.mxu0
    %v358 = vadd.f32 0.0, %v357
    %359 = vdwg.mxu0
    %360 = vrot.lane.b32.xlu0 %v248, 96
    %v361 = vpop.permute.xlu0 %360
    %v362 = vsel %vm257, %v248, 0
    %v364 = vsel %vm257, %v361, 0
    %366 = vmatpush.xpose.msra.mxu0 0.0
    %367 = vmatpush.xpose.msra.mxu0 0.0
    %368 = vmatpush.xpose.msra.mxu0 0.0
    %369 = vmatpush.xpose.msra.mxu0 0.0
    %370 = vmatpush.xpose.msra.mxu0 0.0
    %371 = vmatpush.xpose.msra.mxu0 0.0
    %372 = vmatpush.xpose.msra.mxu0 0.0
    %373 = vmatpush.xpose.msra.mxu0 0.0
    %374 = vmatpush.xpose.msra.mxu0 0.0
    %375 = vmatpush.xpose.msra.mxu0 0.0
    %376 = vmatpush.xpose.msra.mxu0 0.0
    %377 = vmatpush.xpose.msra.mxu0 0.0
    %378 = vmatpush.xpose.msra.mxu0 0.0
    %379 = vmatpush.xpose.msra.mxu0 0.0
    %380 = vmatpush.xpose.msra.mxu0 0.0
    %381 = vmatpush.xpose.msra.mxu0 %v364
    %382 = vmatmul.f32.gmra.mxu0 %v362
    %v383 = vpop.f32.mrf.mxu0
    %v384 = vadd.f32 0.0, %v383
    %385 = vdwg.mxu0
    %386 = vrot.lane.b32.xlu0 %v250, 96
    %v387 = vpop.permute.xlu0 %386
    %v388 = vsel %vm257, %v250, 0
    %v390 = vsel %vm257, %v387, 0
    %392 = vmatpush.xpose.msra.mxu0 0.0
    %393 = vmatpush.xpose.msra.mxu0 0.0
    %394 = vmatpush.xpose.msra.mxu0 0.0
    %395 = vmatpush.xpose.msra.mxu0 0.0
    %396 = vmatpush.xpose.msra.mxu0 0.0
    %397 = vmatpush.xpose.msra.mxu0 0.0
    %398 = vmatpush.xpose.msra.mxu0 0.0
    %399 = vmatpush.xpose.msra.mxu0 0.0
    %400 = vmatpush.xpose.msra.mxu0 0.0
    %401 = vmatpush.xpose.msra.mxu0 0.0
    %402 = vmatpush.xpose.msra.mxu0 0.0
    %403 = vmatpush.xpose.msra.mxu0 0.0
    %404 = vmatpush.xpose.msra.mxu0 0.0
    %405 = vmatpush.xpose.msra.mxu0 0.0
    %406 = vmatpush.xpose.msra.mxu0 0.0
    %407 = vmatpush.xpose.msra.mxu0 %v390
    %408 = vmatmul.f32.gmra.mxu0 %v388
    %v409 = vpop.f32.mrf.mxu0
    %v410 = vadd.f32 0.0, %v409
    %411 = vdwg.mxu0
    %412 = vrot.lane.b32.xlu0 %v252, 96
    %v413 = vpop.permute.xlu0 %412
    %v414 = vsel %vm257, %v252, 0
    %v416 = vsel %vm257, %v413, 0
    %418 = vmatpush.xpose.msra.mxu0 0.0
    %419 = vmatpush.xpose.msra.mxu0 0.0
    %420 = vmatpush.xpose.msra.mxu0 0.0
    %421 = vmatpush.xpose.msra.mxu0 0.0
    %422 = vmatpush.xpose.msra.mxu0 0.0
    %423 = vmatpush.xpose.msra.mxu0 0.0
    %424 = vmatpush.xpose.msra.mxu0 0.0
    %425 = vmatpush.xpose.msra.mxu0 0.0
    %426 = vmatpush.xpose.msra.mxu0 0.0
    %427 = vmatpush.xpose.msra.mxu0 0.0
    %428 = vmatpush.xpose.msra.mxu0 0.0
    %429 = vmatpush.xpose.msra.mxu0 0.0
    %430 = vmatpush.xpose.msra.mxu0 0.0
    %431 = vmatpush.xpose.msra.mxu0 0.0
    %432 = vmatpush.xpose.msra.mxu0 0.0
    %433 = vmatpush.xpose.msra.mxu0 %v416
    %434 = vmatmul.f32.gmra.mxu0 %v414
    %v435 = vpop.f32.mrf.mxu0
    %v436 = vadd.f32 0.0, %v435
    %437 = vdwg.mxu0
    %438 = vrot.lane.b32.xlu0 %v254, 96
    %v439 = vpop.permute.xlu0 %438
    %v440 = vsel %vm257, %v254, 0
    %v442 = vsel %vm257, %v439, 0
    %444 = vmatpush.xpose.msra.mxu0 0.0
    %445 = vmatpush.xpose.msra.mxu0 0.0
    %446 = vmatpush.xpose.msra.mxu0 0.0
    %447 = vmatpush.xpose.msra.mxu0 0.0
    %448 = vmatpush.xpose.msra.mxu0 0.0
    %449 = vmatpush.xpose.msra.mxu0 0.0
    %450 = vmatpush.xpose.msra.mxu0 0.0
    %451 = vmatpush.xpose.msra.mxu0 0.0
    %452 = vmatpush.xpose.msra.mxu0 0.0
    %453 = vmatpush.xpose.msra.mxu0 0.0
    %454 = vmatpush.xpose.msra.mxu0 0.0
    %455 = vmatpush.xpose.msra.mxu0 0.0
    %456 = vmatpush.xpose.msra.mxu0 0.0
    %457 = vmatpush.xpose.msra.mxu0 0.0
    %458 = vmatpush.xpose.msra.mxu0 0.0
    %459 = vmatpush.xpose.msra.mxu0 %v442
    %460 = vmatmul.f32.gmra.mxu0 %v440
    %v461 = vpop.f32.mrf.mxu0
    %v462 = vadd.f32 0.0, %v461
    %463 = vdwg.mxu0
    %v464 = vmul.f32 %v280, 0.35355338
    %v465 = vmul.f32 %v306, 0.35355338
    %v466 = vmul.f32 %v332, 0.35355338
    %v467 = vmul.f32 %v358, 0.35355338
    %v468 = vmul.f32 %v384, 0.35355338
    %v469 = vmul.f32 %v410, 0.35355338
    %v470 = vmul.f32 %v436, 0.35355338
    %v471 = vmul.f32 %v462, 0.35355338
    %v472 = vadd.f32 %v464, %v203
    %v473 = vadd.f32 %v465, %v204
    %v474 = vadd.f32 %v466, %v203
    %v475 = vadd.f32 %v467, %v204
    %v476 = vadd.f32 %v468, %v203
    %v477 = vadd.f32 %v469, %v204
    %v478 = vadd.f32 %v470, %v203
    %v479 = vadd.f32 %v471, %v204
    %v480 = vsel %vm257, %v472, -inf
    %481 = vmax.xlane.f32.xlu0 %v480
    %v482 = vpop.xlane.xlu0 %481
    %v483 = vsel %vm257, %v473, -inf
    %484 = vmax.xlane.f32.xlu0 %v483
    %v485 = vpop.xlane.xlu0 %484
    %v486 = vsel %vm257, %v474, -inf
    %487 = vmax.xlane.f32.xlu0 %v486
    %v488 = vpop.xlane.xlu0 %487
    %v489 = vsel %vm257, %v475, -inf
    %490 = vmax.xlane.f32.xlu0 %v489
    %v491 = vpop.xlane.xlu0 %490
    %v492 = vsel %vm257, %v476, -inf
    %493 = vmax.xlane.f32.xlu0 %v492
    %v494 = vpop.xlane.xlu0 %493
    %v495 = vsel %vm257, %v477, -inf
    %496 = vmax.xlane.f32.xlu0 %v495
    %v497 = vpop.xlane.xlu0 %496
    %v498 = vsel %vm257, %v478, -inf
    %499 = vmax.xlane.f32.xlu0 %v498
    %v500 = vpop.xlane.xlu0 %499
    %v501 = vsel %vm257, %v479, -inf
    %502 = vmax.xlane.f32.xlu0 %v501
    %v503 = vpop.xlane.xlu0 %502
    %v504 = vsub.f32 %v472, %v482
    %v505 = vsub.f32 %v473, %v485
    %v506 = vsub.f32 %v474, %v488
    %v507 = vsub.f32 %v475, %v491
    %v508 = vsub.f32 %v476, %v494
    %v509 = vsub.f32 %v477, %v497
    %v510 = vsub.f32 %v478, %v500
    %v511 = vsub.f32 %v479, %v503
    %v512 = vmul.f32 %v504, 1.442695
    %v513 = vpow.pop %v512
    %v514 = vmul.f32 %v505, 1.442695
    %v515 = vpow.pop %v514
    %v516 = vmul.f32 %v506, 1.442695
    %v517 = vpow.pop %v516
    %v518 = vmul.f32 %v507, 1.442695
    %v519 = vpow.pop %v518
    %v520 = vmul.f32 %v508, 1.442695
    %v521 = vpow.pop %v520
    %v522 = vmul.f32 %v509, 1.442695
    %v523 = vpow.pop %v522
    %v524 = vmul.f32 %v510, 1.442695
    %v525 = vpow.pop %v524
    %v526 = vmul.f32 %v511, 1.442695
    %v527 = vpow.pop %v526
    %v528 = vsel %vm257, %v513, 0.0
    %529 = vadd.xlane.f32.xlu0 %v528
    %v530 = vpop.xlane.xlu0 %529
    %v531 = vsel %vm257, %v515, 0.0
    %532 = vadd.xlane.f32.xlu0 %v531
    %v533 = vpop.xlane.xlu0 %532
    %v534 = vsel %vm257, %v517, 0.0
    %535 = vadd.xlane.f32.xlu0 %v534
    %v536 = vpop.xlane.xlu0 %535
    %v537 = vsel %vm257, %v519, 0.0
    %538 = vadd.xlane.f32.xlu0 %v537
    %v539 = vpop.xlane.xlu0 %538
    %v540 = vsel %vm257, %v521, 0.0
    %541 = vadd.xlane.f32.xlu0 %v540
    %v542 = vpop.xlane.xlu0 %541
    %v543 = vsel %vm257, %v523, 0.0
    %544 = vadd.xlane.f32.xlu0 %v543
    %v545 = vpop.xlane.xlu0 %544
    %v546 = vsel %vm257, %v525, 0.0
    %547 = vadd.xlane.f32.xlu0 %v546
    %v548 = vpop.xlane.xlu0 %547
    %v549 = vsel %vm257, %v527, 0.0
    %550 = vadd.xlane.f32.xlu0 %v549
    %v551 = vpop.xlane.xlu0 %550
    %v552 = vrcp.pop %v530
    %v553 = vrcp.pop %v533
    %v554 = vrcp.pop %v536
    %v555 = vrcp.pop %v539
    %v556 = vrcp.pop %v542
    %v557 = vrcp.pop %v545
    %v558 = vrcp.pop %v548
    %v559 = vrcp.pop %v551
    %v560 = vmul.f32 %v513, %v552
    %v561 = vmul.f32 %v515, %v553
    %v562 = vmul.f32 %v517, %v554
    %v563 = vmul.f32 %v519, %v555
    %v564 = vmul.f32 %v521, %v556
    %v565 = vmul.f32 %v523, %v557
    %v566 = vmul.f32 %v525, %v558
    %v567 = vmul.f32 %v527, %v559
    %568 = vrot.lane.b32.xlu0 %v236, 64
    %v569 = vpop.permute.xlu0 %568
    %v572 = vsel %vm257, %v560, 0
    %574 = vmatpush.msra.mxu0 0.0
    %575 = vmatpush.msra.mxu0 0.0
    %576 = vmatpush.msra.mxu0 0.0
    %577 = vmatpush.msra.mxu0 0.0
    %578 = vmatpush.msra.mxu0 0.0
    %579 = vmatpush.msra.mxu0 0.0
    %580 = vmatpush.msra.mxu0 0.0
    %581 = vmatpush.msra.mxu0 0.0
    %582 = vmatpush.msra.mxu0 0.0
    %583 = vmatpush.msra.mxu0 0.0
    %584 = vmatpush.msra.mxu0 0.0
    %585 = vmatpush.msra.mxu0 0.0
    %586 = vmatpush.msra.mxu0 0.0
    %587 = vmatpush.msra.mxu0 0.0
    %588 = vmatpush.msra.mxu0 0.0
    %589 = vmatpush.msra.mxu0 %v569
    %590 = vmatmul.f32.gmra.mxu0 %v572
    %v591 = vpop.f32.mrf.mxu0
    %v592 = vadd.f32 0.0, %v591
    %593 = vdwg.mxu0
    %594 = vrot.lane.b32.xlu0 %v239, 64
    %v595 = vpop.permute.xlu0 %594
    %v598 = vsel %vm257, %v561, 0
    %600 = vmatpush.msra.mxu0 0.0
    %601 = vmatpush.msra.mxu0 0.0
    %602 = vmatpush.msra.mxu0 0.0
    %603 = vmatpush.msra.mxu0 0.0
    %604 = vmatpush.msra.mxu0 0.0
    %605 = vmatpush.msra.mxu0 0.0
    %606 = vmatpush.msra.mxu0 0.0
    %607 = vmatpush.msra.mxu0 0.0
    %608 = vmatpush.msra.mxu0 0.0
    %609 = vmatpush.msra.mxu0 0.0
    %610 = vmatpush.msra.mxu0 0.0
    %611 = vmatpush.msra.mxu0 0.0
    %612 = vmatpush.msra.mxu0 0.0
    %613 = vmatpush.msra.mxu0 0.0
    %614 = vmatpush.msra.mxu0 0.0
    %615 = vmatpush.msra.mxu0 %v595
    %616 = vmatmul.f32.gmra.mxu0 %v598
    %v617 = vpop.f32.mrf.mxu0
    %v618 = vadd.f32 0.0, %v617
    %619 = vdwg.mxu0
    %620 = vrot.lane.b32.xlu0 %v244, 64
    %v621 = vpop.permute.xlu0 %620
    %v624 = vsel %vm257, %v562, 0
    %626 = vmatpush.msra.mxu0 0.0
    %627 = vmatpush.msra.mxu0 0.0
    %628 = vmatpush.msra.mxu0 0.0
    %629 = vmatpush.msra.mxu0 0.0
    %630 = vmatpush.msra.mxu0 0.0
    %631 = vmatpush.msra.mxu0 0.0
    %632 = vmatpush.msra.mxu0 0.0
    %633 = vmatpush.msra.mxu0 0.0
    %634 = vmatpush.msra.mxu0 0.0
    %635 = vmatpush.msra.mxu0 0.0
    %636 = vmatpush.msra.mxu0 0.0
    %637 = vmatpush.msra.mxu0 0.0
    %638 = vmatpush.msra.mxu0 0.0
    %639 = vmatpush.msra.mxu0 0.0
    %640 = vmatpush.msra.mxu0 0.0
    %641 = vmatpush.msra.mxu0 %v621
    %642 = vmatmul.f32.gmra.mxu0 %v624
    %v643 = vpop.f32.mrf.mxu0
    %v644 = vadd.f32 0.0, %v643
    %645 = vdwg.mxu0
    %646 = vrot.lane.b32.xlu0 %v246, 64
    %v647 = vpop.permute.xlu0 %646
    %v650 = vsel %vm257, %v563, 0
    %652 = vmatpush.msra.mxu0 0.0
    %653 = vmatpush.msra.mxu0 0.0
    %654 = vmatpush.msra.mxu0 0.0
    %655 = vmatpush.msra.mxu0 0.0
    %656 = vmatpush.msra.mxu0 0.0
    %657 = vmatpush.msra.mxu0 0.0
    %658 = vmatpush.msra.mxu0 0.0
    %659 = vmatpush.msra.mxu0 0.0
    %660 = vmatpush.msra.mxu0 0.0
    %661 = vmatpush.msra.mxu0 0.0
    %662 = vmatpush.msra.mxu0 0.0
    %663 = vmatpush.msra.mxu0 0.0
    %664 = vmatpush.msra.mxu0 0.0
    %665 = vmatpush.msra.mxu0 0.0
    %666 = vmatpush.msra.mxu0 0.0
    %667 = vmatpush.msra.mxu0 %v647
    %668 = vmatmul.f32.gmra.mxu0 %v650
    %v669 = vpop.f32.mrf.mxu0
    %v670 = vadd.f32 0.0, %v669
    %671 = vdwg.mxu0
    %672 = vrot.lane.b32.xlu0 %v248, 64
    %v673 = vpop.permute.xlu0 %672
    %v676 = vsel %vm257, %v564, 0
    %678 = vmatpush.msra.mxu0 0.0
    %679 = vmatpush.msra.mxu0 0.0
    %680 = vmatpush.msra.mxu0 0.0
    %681 = vmatpush.msra.mxu0 0.0
    %682 = vmatpush.msra.mxu0 0.0
    %683 = vmatpush.msra.mxu0 0.0
    %684 = vmatpush.msra.mxu0 0.0
    %685 = vmatpush.msra.mxu0 0.0
    %686 = vmatpush.msra.mxu0 0.0
    %687 = vmatpush.msra.mxu0 0.0
    %688 = vmatpush.msra.mxu0 0.0
    %689 = vmatpush.msra.mxu0 0.0
    %690 = vmatpush.msra.mxu0 0.0
    %691 = vmatpush.msra.mxu0 0.0
    %692 = vmatpush.msra.mxu0 0.0
    %693 = vmatpush.msra.mxu0 %v673
    %694 = vmatmul.f32.gmra.mxu0 %v676
    %v695 = vpop.f32.mrf.mxu0
    %v696 = vadd.f32 0.0, %v695
    %697 = vdwg.mxu0
    %698 = vrot.lane.b32.xlu0 %v250, 64
    %v699 = vpop.permute.xlu0 %698
    %v702 = vsel %vm257, %v565, 0
    %704 = vmatpush.msra.mxu0 0.0
    %705 = vmatpush.msra.mxu0 0.0
    %706 = vmatpush.msra.mxu0 0.0
    %707 = vmatpush.msra.mxu0 0.0
    %708 = vmatpush.msra.mxu0 0.0
    %709 = vmatpush.msra.mxu0 0.0
    %710 = vmatpush.msra.mxu0 0.0
    %711 = vmatpush.msra.mxu0 0.0
    %712 = vmatpush.msra.mxu0 0.0
    %713 = vmatpush.msra.mxu0 0.0
    %714 = vmatpush.msra.mxu0 0.0
    %715 = vmatpush.msra.mxu0 0.0
    %716 = vmatpush.msra.mxu0 0.0
    %717 = vmatpush.msra.mxu0 0.0
    %718 = vmatpush.msra.mxu0 0.0
    %719 = vmatpush.msra.mxu0 %v699
    %720 = vmatmul.f32.gmra.mxu0 %v702
    %v721 = vpop.f32.mrf.mxu0
    %v722 = vadd.f32 0.0, %v721
    %723 = vdwg.mxu0
    %724 = vrot.lane.b32.xlu0 %v252, 64
    %v725 = vpop.permute.xlu0 %724
    %v728 = vsel %vm257, %v566, 0
    %730 = vmatpush.msra.mxu0 0.0
    %731 = vmatpush.msra.mxu0 0.0
    %732 = vmatpush.msra.mxu0 0.0
    %733 = vmatpush.msra.mxu0 0.0
    %734 = vmatpush.msra.mxu0 0.0
    %735 = vmatpush.msra.mxu0 0.0
    %736 = vmatpush.msra.mxu0 0.0
    %737 = vmatpush.msra.mxu0 0.0
    %738 = vmatpush.msra.mxu0 0.0
    %739 = vmatpush.msra.mxu0 0.0
    %740 = vmatpush.msra.mxu0 0.0
    %741 = vmatpush.msra.mxu0 0.0
    %742 = vmatpush.msra.mxu0 0.0
    %743 = vmatpush.msra.mxu0 0.0
    %744 = vmatpush.msra.mxu0 0.0
    %745 = vmatpush.msra.mxu0 %v725
    %746 = vmatmul.f32.gmra.mxu0 %v728
    %v747 = vpop.f32.mrf.mxu0
    %v748 = vadd.f32 0.0, %v747
    %749 = vdwg.mxu0
    %750 = vrot.lane.b32.xlu0 %v254, 64
    %v751 = vpop.permute.xlu0 %750
    %v754 = vsel %vm257, %v567, 0
    %756 = vmatpush.msra.mxu0 0.0
    %757 = vmatpush.msra.mxu0 0.0
    %758 = vmatpush.msra.mxu0 0.0
    %759 = vmatpush.msra.mxu0 0.0
    %760 = vmatpush.msra.mxu0 0.0
    %761 = vmatpush.msra.mxu0 0.0
    %762 = vmatpush.msra.mxu0 0.0
    %763 = vmatpush.msra.mxu0 0.0
    %764 = vmatpush.msra.mxu0 0.0
    %765 = vmatpush.msra.mxu0 0.0
    %766 = vmatpush.msra.mxu0 0.0
    %767 = vmatpush.msra.mxu0 0.0
    %768 = vmatpush.msra.mxu0 0.0
    %769 = vmatpush.msra.mxu0 0.0
    %770 = vmatpush.msra.mxu0 0.0
    %771 = vmatpush.msra.mxu0 %v751
    %772 = vmatmul.f32.gmra.mxu0 %v754
    %v773 = vpop.f32.mrf.mxu0
    %v774 = vadd.f32 0.0, %v773
    %775 = vdwg.mxu0
    %778 = vrot.lane.b32.xlu0 %v644, 8
    %v779 = vpop.permute.xlu0 %778
    %780 = vrot.lane.b32.xlu0 %v670, 8
    %v781 = vpop.permute.xlu0 %780
    %786 = vrot.lane.b32.xlu0 %v696, 16
    %v787 = vpop.permute.xlu0 %786
    %788 = vrot.lane.b32.xlu0 %v722, 16
    %v789 = vpop.permute.xlu0 %788
    %794 = vrot.lane.b32.xlu0 %v748, 24
    %v795 = vpop.permute.xlu0 %794
    %796 = vrot.lane.b32.xlu0 %v774, 24
    %v797 = vpop.permute.xlu0 %796
    %v800 = vsel %vm257, %v592, %v779
    %v801 = vsel %vm257, %v618, %v781
    %vm802 = vcmask 130048
    %v803 = vsel %vm802, %v800, %v787
    %v804 = vsel %vm802, %v801, %v789
    %vm805 = vcmask 195584
    %v806 = vsel %vm805, %v803, %v795
    %v807 = vsel %vm805, %v804, %v797
    %v808 = vld [vmem:[#allocation2] sm:$0xff]
    %v809 = vld [vmem:[#allocation2 + $0x8] sm:$0xff]
    %v810 = vld [vmem:[#allocation2 + $0x10] sm:$0xff]
    %v811 = vld [vmem:[#allocation2 + $0x18] sm:$0xff]
    %v812 = vld [vmem:[#allocation2 + $0xc4] sm:$0x1]
    %v813 = vperm.slane %v812, 0
    %818 = vrot.lane.b32.xlu0 %v808, 32
    %v819 = vpop.permute.xlu0 %818
    %820 = vrot.lane.b32.xlu0 %v809, 32
    %v821 = vpop.permute.xlu0 %820
    %822 = vrot.lane.b32.xlu0 %v810, 32
    %v823 = vpop.permute.xlu0 %822
    %824 = vrot.lane.b32.xlu0 %v811, 32
    %v825 = vpop.permute.xlu0 %824
    %v831 = vsel %vm211, %v806, 0
    %v834 = vsel %vm211, %v807, 0
    %836 = vmatpush.msra.mxu0 0.0
    %837 = vmatpush.msra.mxu0 0.0
    %838 = vmatpush.msra.mxu0 0.0
    %839 = vmatpush.msra.mxu0 0.0
    %840 = vmatpush.msra.mxu0 0.0
    %841 = vmatpush.msra.mxu0 0.0
    %842 = vmatpush.msra.mxu0 0.0
    %843 = vmatpush.msra.mxu0 0.0
    %844 = vmatpush.msra.mxu0 0.0
    %845 = vmatpush.msra.mxu0 0.0
    %846 = vmatpush.msra.mxu0 0.0
    %847 = vmatpush.msra.mxu0 0.0
    %848 = vmatpush.msra.mxu0 %v825
    %849 = vmatpush.msra.mxu0 %v823
    %850 = vmatpush.msra.mxu0 %v821
    %851 = vmatpush.msra.mxu0 %v819
    %852 = vmatmul.f32.gmra.mxu0 %v831
    %v853 = vpop.f32.mrf.mxu0
    %v854 = vadd.f32 %v813, %v853
    %855 = vmatmul.f32.gmra.mxu0 %v834
    %v856 = vpop.f32.mrf.mxu0
    %v857 = vadd.f32 %v813, %v856
    %858 = vdwg.mxu0
    %v859 = vadd.f32 %v192, %v854
    %v860 = vadd.f32 %v195, %v857
    %v861 = vsel %vm211, %v859, 0.0
    %862 = vadd.xlane.f32.xlu0 %v861
    %v863 = vpop.xlane.xlu0 %862
    %v864 = vsel %vm211, %v860, 0.0
    %865 = vadd.xlane.f32.xlu0 %v864
    %v866 = vpop.xlane.xlu0 %865
    %v867 = vrcp.pop 32.0
    %v868 = vmul.f32 32.0, %v867
    %v869 = vsub.f32 1.0, %v868
    %v870 = vmul.f32 %v867, %v869
    %v871 = vadd.f32 %v867, %v870
    %vm872 = vweird.f32 %v867
    %v873 = vsel %vm872, %v867, %v871
    %v874 = vmul.f32 %v863, %v873
    %v875 = vmul.f32 %v866, %v873
    %v876 = vsub.f32 %v859, %v874
    %v877 = vsub.f32 %v860, %v875
    %v878 = vmul.f32 %v876, %v876
    %v879 = vmul.f32 %v877, %v877
    %v880 = vsel %vm211, %v878, 0.0
    %881 = vadd.xlane.f32.xlu0 %v880
    %v882 = vpop.xlane.xlu0 %881
    %v883 = vsel %vm211, %v879, 0.0
    %884 = vadd.xlane.f32.xlu0 %v883
    %v885 = vpop.xlane.xlu0 %884
    %v886 = vmul.f32 %v882, %v873
    %v887 = vmul.f32 %v885, %v873
    %v888 = vadd.f32 %v886, 1e-05
    %v889 = vadd.f32 %v887, 1e-05
    %v890 = vrsqrt.pop %v888
    %v891 = vmul.f32 %v890, %v888
    %v892 = vmul.f32 %v891, %v890
    %v893 = vmul.f32 0.5, %v892
    %v894 = vsub.f32 1.5, %v893
    %v895 = vmul.f32 %v890, %v894
    %vm896 = vweird.f32 %v888
    %vm897 = vweird.f32 %v890
    %vm898 = vmor %vm896, %vm897
    %v899 = vsel %vm898, %v890, %v895
    %v900 = vrsqrt.pop %v889
    %v901 = vmul.f32 %v900, %v889
    %v902 = vmul.f32 %v901, %v900
    %v903 = vmul.f32 0.5, %v902
    %v904 = vsub.f32 1.5, %v903
    %v905 = vmul.f32 %v900, %v904
    %vm906 = vweird.f32 %v889
    %vm907 = vweird.f32 %v900
    %vm908 = vmor %vm906, %vm907
    %v909 = vsel %vm908, %v900, %v905
    %v910 = vmul.f32 %v876, %v899
    %v911 = vmul.f32 %v877, %v909
    %913 = vrot.lane.b32.xlu0 %v813, 96
    %v914 = vpop.permute.xlu0 %913
    %v916 = vmul.f32 %v910, %v914
    %v917 = vmul.f32 %v911, %v914
    %918 = vrot.lane.b32.xlu0 %v813, 64
    %v919 = vpop.permute.xlu0 %918
    %v921 = vadd.f32 %v916, %v919
    %v922 = vadd.f32 %v917, %v919
    %v923 = vld [vmem:[#allocation2 + $0x20] sm:$0xff]
    %v924 = vld [vmem:[#allocation2 + $0x28] sm:$0xff]
    %v925 = vld [vmem:[#allocation2 + $0x30] sm:$0xff]
    %v926 = vld [vmem:[#allocation2 + $0x38] sm:$0xff]
    %v927 = vld [vmem:[#allocation2 + $0xc1] sm:$0x1]
    %v928 = vperm.slane %v927, 0
    %v930 = vsel %vm211, %v921, 0
    %v933 = vsel %vm211, %v922, 0
    %935 = vmatpush.msra.mxu0 0.0
    %936 = vmatpush.msra.mxu0 0.0
    %937 = vmatpush.msra.mxu0 0.0
    %938 = vmatpush.msra.mxu0 0.0
    %939 = vmatpush.msra.mxu0 0.0
    %940 = vmatpush.msra.mxu0 0.0
    %941 = vmatpush.msra.mxu0 0.0
    %942 = vmatpush.msra.mxu0 0.0
    %943 = vmatpush.msra.mxu0 0.0
    %944 = vmatpush.msra.mxu0 0.0
    %945 = vmatpush.msra.mxu0 0.0
    %946 = vmatpush.msra.mxu0 0.0
    %947 = vmatpush.msra.mxu0 %v926
    %948 = vmatpush.msra.mxu0 %v925
    %949 = vmatpush.msra.mxu0 %v924
    %950 = vmatpush.msra.mxu0 %v923
    %951 = vmatmul.f32.gmra.mxu0 %v930
    %v952 = vpop.f32.mrf.mxu0
    %v953 = vadd.f32 %v928, %v952
    %954 = vmatmul.f32.gmra.mxu0 %v933
    %v955 = vpop.f32.mrf.mxu0
    %v956 = vadd.f32 %v928, %v955
    %957 = vdwg.mxu0
    %v958 = vmax.f32 %v953, 0.0
    %v959 = vmax.f32 %v956, 0.0
    %v960 = vld [vmem:[#allocation2 + $0x80] sm:$0xff]
    %v961 = vld [vmem:[#allocation2 + $0x88] sm:$0xff]
    %v962 = vld [vmem:[#allocation2 + $0x90] sm:$0xff]
    %v963 = vld [vmem:[#allocation2 + $0x98] sm:$0xff]
    %v964 = vld [vmem:[#allocation2 + $0xa0] sm:$0xff]
    %v965 = vld [vmem:[#allocation2 + $0xa8] sm:$0xff]
    %v966 = vld [vmem:[#allocation2 + $0xb0] sm:$0xff]
    %v967 = vld [vmem:[#allocation2 + $0xb8] sm:$0xff]
    %968 = vrot.lane.b32.xlu0 %v813, 32
    %v969 = vpop.permute.xlu0 %968
    %vm971 = vcmask 523264
    %v973 = vsel %vm971, %v958, 0
    %v976 = vsel %vm971, %v959, 0
    %978 = vmatpush.msra.mxu0 0.0
    %979 = vmatpush.msra.mxu0 0.0
    %980 = vmatpush.msra.mxu0 0.0
    %981 = vmatpush.msra.mxu0 0.0
    %982 = vmatpush.msra.mxu0 0.0
    %983 = vmatpush.msra.mxu0 0.0
    %984 = vmatpush.msra.mxu0 0.0
    %985 = vmatpush.msra.mxu0 0.0
    %986 = vmatpush.msra.mxu0 %v967
    %987 = vmatpush.msra.mxu0 %v966
    %988 = vmatpush.msra.mxu0 %v965
    %989 = vmatpush.msra.mxu0 %v964
    %990 = vmatpush.msra.mxu0 %v963
    %991 = vmatpush.msra.mxu0 %v962
    %992 = vmatpush.msra.mxu0 %v961
    %993 = vmatpush.msra.mxu0 %v960
    %994 = vmatmul.f32.gmra.mxu0 %v973
    %v995 = vpop.f32.mrf.mxu0
    %v996 = vadd.f32 %v969, %v995
    %997 = vmatmul.f32.gmra.mxu0 %v976
    %v998 = vpop.f32.mrf.mxu0
    %v999 = vadd.f32 %v969, %v998
    %1000 = vdwg.mxu0
    %v1001 = vadd.f32 %v921, %v996
    %v1002 = vadd.f32 %v922, %v999
    %v1003 = vld [vmem:[#allocation2 + $0xc5] sm:$0x1]
    %v1004 = vsel %vm211, %v1001, 0.0
    %1005 = vadd.xlane.f32.xlu0 %v1004
    %v1006 = vpop.xlane.xlu0 %1005
    %v1007 = vsel %vm211, %v1002, 0.0
    %1008 = vadd.xlane.f32.xlu0 %v1007
    %v1009 = vpop.xlane.xlu0 %1008
    %v1010 = vmul.f32 %v1006, %v873
    %v1011 = vmul.f32 %v1009, %v873
    %v1012 = vsub.f32 %v1001, %v1010
    %v1013 = vsub.f32 %v1002, %v1011
    %v1014 = vmul.f32 %v1012, %v1012
    %v1015 = vmul.f32 %v1013, %v1013
    %v1016 = vsel %vm211, %v1014, 0.0
    %1017 = vadd.xlane.f32.xlu0 %v1016
    %v1018 = vpop.xlane.xlu0 %1017
    %v1019 = vsel %vm211, %v1015, 0.0
    %1020 = vadd.xlane.f32.xlu0 %v1019
    %v1021 = vpop.xlane.xlu0 %1020
    %v1022 = vmul.f32 %v1018, %v873
    %v1023 = vmul.f32 %v1021, %v873
    %v1024 = vadd.f32 %v1022, 1e-05
    %v1025 = vadd.f32 %v1023, 1e-05
    %v1026 = vrsqrt.pop %v1024
    %v1027 = vmul.f32 %v1026, %v1024
    %v1028 = vmul.f32 %v1027, %v1026
    %v1029 = vmul.f32 0.5, %v1028
    %v1030 = vsub.f32 1.5, %v1029
    %v1031 = vmul.f32 %v1026, %v1030
    %vm1032 = vweird.f32 %v1024
    %vm1033 = vweird.f32 %v1026
    %vm1034 = vmor %vm1032, %vm1033
    %v1035 = vsel %vm1034, %v1026, %v1031
    %v1036 = vrsqrt.pop %v1025
    %v1037 = vmul.f32 %v1036, %v1025
    %v1038 = vmul.f32 %v1037, %v1036
    %v1039 = vmul.f32 0.5, %v1038
    %v1040 = vsub.f32 1.5, %v1039
    %v1041 = vmul.f32 %v1036, %v1040
    %vm1042 = vweird.f32 %v1025
    %vm1043 = vweird.f32 %v1036
    %vm1044 = vmor %vm1042, %vm1043
    %v1045 = vsel %vm1044, %v1036, %v1041
    %v1046 = vmul.f32 %v1012, %v1035
    %v1047 = vmul.f32 %v1013, %v1045
    %v1048 = vperm.slane %v1003, 0
    %v1049 = vmul.f32 %v1046, %v1048
    %v1050 = vmul.f32 %v1047, %v1048
    %1052 = vrot.lane.b32.xlu0 %v1048, 96
    %v1053 = vpop.permute.xlu0 %1052
    %v1055 = vadd.f32 %v1049, %v1053
    %v1056 = vadd.f32 %v1050, %v1053
    %v1057 = vld [vmem:[%s1 + $0x8] sm:$0xff]
    %v1058 = vld [vmem:[%s1 + $0x18] sm:$0xff]
    %v1059 = vld [vmem:[#allocation2 + $0xc0] sm:$0x1]
    %v1060 = vperm.slane %v1059, 0
    %1065 = vrot.lane.b32.xlu0 %v923, 64
    %v1066 = vpop.permute.xlu0 %1065
    %1067 = vrot.lane.b32.xlu0 %v924, 64
    %v1068 = vpop.permute.xlu0 %1067
    %1069 = vrot.lane.b32.xlu0 %v925, 64
    %v1070 = vpop.permute.xlu0 %1069
    %1071 = vrot.lane.b32.xlu0 %v926, 64
    %v1072 = vpop.permute.xlu0 %1071
    %1078 = vrot.lane.b32.xlu0 %v1060, 32
    %v1079 = vpop.permute.xlu0 %1078
    %v1082 = vsel %vm211, %v198, 0
    %v1085 = vsel %vm211, %v201, 0
    %1087 = vmatpush.msra.mxu0 0.0
    %1088 = vmatpush.msra.mxu0 0.0
    %1089 = vmatpush.msra.mxu0 0.0
    %1090 = vmatpush.msra.mxu0 0.0
    %1091 = vmatpush.msra.mxu0 0.0
    %1092 = vmatpush.msra.mxu0 0.0
    %1093 = vmatpush.msra.mxu0 0.0
    %1094 = vmatpush.msra.mxu0 0.0
    %1095 = vmatpush.msra.mxu0 0.0
    %1096 = vmatpush.msra.mxu0 0.0
    %1097 = vmatpush.msra.mxu0 0.0
    %1098 = vmatpush.msra.mxu0 0.0
    %1099 = vmatpush.msra.mxu0 %v1072
    %1100 = vmatpush.msra.mxu0 %v1070
    %1101 = vmatpush.msra.mxu0 %v1068
    %1102 = vmatpush.msra.mxu0 %v1066
    %1103 = vmatmul.f32.gmra.mxu0 %v1082
    %v1104 = vpop.f32.mrf.mxu0
    %v1105 = vadd.f32 %v1079, %v1104
    %1106 = vmatmul.f32.gmra.mxu0 %v1085
    %v1107 = vpop.f32.mrf.mxu0
    %v1108 = vadd.f32 %v1079, %v1107
    %1109 = vdwg.mxu0
    %v1110 = vld [vmem:[#allocation2 + $0x40] sm:$0xff]
    %v1111 = vld [vmem:[#allocation2 + $0x48] sm:$0xff]
    %v1112 = vld [vmem:[#allocation2 + $0x50] sm:$0xff]
    %v1113 = vld [vmem:[#allocation2 + $0x58] sm:$0xff]
    %v1114 = vld [vmem:[#allocation2 + $0xc2] sm:$0x1]
    %v1115 = vperm.slane %v1114, 0
    %v1117 = vsel %vm211, %v1055, 0
    %v1120 = vsel %vm211, %v1056, 0
    %1122 = vmatpush.msra.mxu0 0.0
    %1123 = vmatpush.msra.mxu0 0.0
    %1124 = vmatpush.msra.mxu0 0.0
    %1125 = vmatpush.msra.mxu0 0.0
    %1126 = vmatpush.msra.mxu0 0.0
    %1127 = vmatpush.msra.mxu0 0.0
    %1128 = vmatpush.msra.mxu0 0.0
    %1129 = vmatpush.msra.mxu0 0.0
    %1130 = vmatpush.msra.mxu0 0.0
    %1131 = vmatpush.msra.mxu0 0.0
    %1132 = vmatpush.msra.mxu0 0.0
    %1133 = vmatpush.msra.mxu0 0.0
    %1134 = vmatpush.msra.mxu0 %v1113
    %1135 = vmatpush.msra.mxu0 %v1112
    %1136 = vmatpush.msra.mxu0 %v1111
    %1137 = vmatpush.msra.mxu0 %v1110
    %1138 = vmatmul.f32.gmra.mxu0 %v1117
    %v1139 = vpop.f32.mrf.mxu0
    %v1140 = vadd.f32 %v1115, %v1139
    %1141 = vmatmul.f32.gmra.mxu0 %v1120
    %v1142 = vpop.f32.mrf.mxu0
    %v1143 = vadd.f32 %v1115, %v1142
    %1144 = vdwg.mxu0
    %1147 = vrot.lane.b32.xlu0 %v1105, 120
    %v1148 = vpop.permute.xlu0 %1147
    %1149 = vrot.lane.b32.xlu0 %v1108, 120
    %v1150 = vpop.permute.xlu0 %1149
    %1151 = vrot.lane.b32.xlu0 %v1105, 112
    %v1152 = vpop.permute.xlu0 %1151
    %1153 = vrot.lane.b32.xlu0 %v1108, 112
    %v1154 = vpop.permute.xlu0 %1153
    %1155 = vrot.lane.b32.xlu0 %v1105, 104
    %v1156 = vpop.permute.xlu0 %1155
    %1157 = vrot.lane.b32.xlu0 %v1108, 104
    %v1158 = vpop.permute.xlu0 %1157
    %1161 = vrot.lane.b32.xlu0 %v1140, 120
    %v1162 = vpop.permute.xlu0 %1161
    %1163 = vrot.lane.b32.xlu0 %v1143, 120
    %v1164 = vpop.permute.xlu0 %1163
    %1165 = vrot.lane.b32.xlu0 %v1140, 112
    %v1166 = vpop.permute.xlu0 %1165
    %1167 = vrot.lane.b32.xlu0 %v1143, 112
    %v1168 = vpop.permute.xlu0 %1167
    %1169 = vrot.lane.b32.xlu0 %v1140, 104
    %v1170 = vpop.permute.xlu0 %1169
    %1171 = vrot.lane.b32.xlu0 %v1143, 104
    %v1172 = vpop.permute.xlu0 %1171
    %v1173 = vsel %vm257, %v1105, 0
    %v1175 = vsel %vm257, %v1140, 0
    %1177 = vmatpush.xpose.msra.mxu0 0.0
    %1178 = vmatpush.xpose.msra.mxu0 0.0
    %1179 = vmatpush.xpose.msra.mxu0 0.0
    %1180 = vmatpush.xpose.msra.mxu0 0.0
    %1181 = vmatpush.xpose.msra.mxu0 0.0
    %1182 = vmatpush.xpose.msra.mxu0 0.0
    %1183 = vmatpush.xpose.msra.mxu0 0.0
    %1184 = vmatpush.xpose.msra.mxu0 0.0
    %1185 = vmatpush.xpose.msra.mxu0 0.0
    %1186 = vmatpush.xpose.msra.mxu0 0.0
    %1187 = vmatpush.xpose.msra.mxu0 0.0
    %1188 = vmatpush.xpose.msra.mxu0 0.0
    %1189 = vmatpush.xpose.msra.mxu0 0.0
    %1190 = vmatpush.xpose.msra.mxu0 0.0
    %1191 = vmatpush.xpose.msra.mxu0 0.0
    %1192 = vmatpush.xpose.msra.mxu0 %v1175
    %1193 = vmatmul.f32.gmra.mxu0 %v1173
    %v1194 = vpop.f32.mrf.mxu0
    %v1195 = vadd.f32 0.0, %v1194
    %1196 = vdwg.mxu0
    %v1197 = vsel %vm257, %v1108, 0
    %v1199 = vsel %vm257, %v1143, 0
    %1201 = vmatpush.xpose.msra.mxu0 0.0
    %1202 = vmatpush.xpose.msra.mxu0 0.0
    %1203 = vmatpush.xpose.msra.mxu0 0.0
    %1204 = vmatpush.xpose.msra.mxu0 0.0
    %1205 = vmatpush.xpose.msra.mxu0 0.0
    %1206 = vmatpush.xpose.msra.mxu0 0.0
    %1207 = vmatpush.xpose.msra.mxu0 0.0
    %1208 = vmatpush.xpose.msra.mxu0 0.0
    %1209 = vmatpush.xpose.msra.mxu0 0.0
    %1210 = vmatpush.xpose.msra.mxu0 0.0
    %1211 = vmatpush.xpose.msra.mxu0 0.0
    %1212 = vmatpush.xpose.msra.mxu0 0.0
    %1213 = vmatpush.xpose.msra.mxu0 0.0
    %1214 = vmatpush.xpose.msra.mxu0 0.0
    %1215 = vmatpush.xpose.msra.mxu0 0.0
    %1216 = vmatpush.xpose.msra.mxu0 %v1199
    %1217 = vmatmul.f32.gmra.mxu0 %v1197
    %v1218 = vpop.f32.mrf.mxu0
    %v1219 = vadd.f32 0.0, %v1218
    %1220 = vdwg.mxu0
    %v1221 = vsel %vm257, %v1148, 0
    %v1223 = vsel %vm257, %v1162, 0
    %1225 = vmatpush.xpose.msra.mxu0 0.0
    %1226 = vmatpush.xpose.msra.mxu0 0.0
    %1227 = vmatpush.xpose.msra.mxu0 0.0
    %1228 = vmatpush.xpose.msra.mxu0 0.0
    %1229 = vmatpush.xpose.msra.mxu0 0.0
    %1230 = vmatpush.xpose.msra.mxu0 0.0
    %1231 = vmatpush.xpose.msra.mxu0 0.0
    %1232 = vmatpush.xpose.msra.mxu0 0.0
    %1233 = vmatpush.xpose.msra.mxu0 0.0
    %1234 = vmatpush.xpose.msra.mxu0 0.0
    %1235 = vmatpush.xpose.msra.mxu0 0.0
    %1236 = vmatpush.xpose.msra.mxu0 0.0
    %1237 = vmatpush.xpose.msra.mxu0 0.0
    %1238 = vmatpush.xpose.msra.mxu0 0.0
    %1239 = vmatpush.xpose.msra.mxu0 0.0
    %1240 = vmatpush.xpose.msra.mxu0 %v1223
    %1241 = vmatmul.f32.gmra.mxu0 %v1221
    %v1242 = vpop.f32.mrf.mxu0
    %v1243 = vadd.f32 0.0, %v1242
    %1244 = vdwg.mxu0
    %v1245 = vsel %vm257, %v1150, 0
    %v1247 = vsel %vm257, %v1164, 0
    %1249 = vmatpush.xpose.msra.mxu0 0.0
    %1250 = vmatpush.xpose.msra.mxu0 0.0
    %1251 = vmatpush.xpose.msra.mxu0 0.0
    %1252 = vmatpush.xpose.msra.mxu0 0.0
    %1253 = vmatpush.xpose.msra.mxu0 0.0
    %1254 = vmatpush.xpose.msra.mxu0 0.0
    %1255 = vmatpush.xpose.msra.mxu0 0.0
    %1256 = vmatpush.xpose.msra.mxu0 0.0
    %1257 = vmatpush.xpose.msra.mxu0 0.0
    %1258 = vmatpush.xpose.msra.mxu0 0.0
    %1259 = vmatpush.xpose.msra.mxu0 0.0
    %1260 = vmatpush.xpose.msra.mxu0 0.0
    %1261 = vmatpush.xpose.msra.mxu0 0.0
    %1262 = vmatpush.xpose.msra.mxu0 0.0
    %1263 = vmatpush.xpose.msra.mxu0 0.0
    %1264 = vmatpush.xpose.msra.mxu0 %v1247
    %1265 = vmatmul.f32.gmra.mxu0 %v1245
    %v1266 = vpop.f32.mrf.mxu0
    %v1267 = vadd.f32 0.0, %v1266
    %1268 = vdwg.mxu0
    %v1269 = vsel %vm257, %v1152, 0
    %v1271 = vsel %vm257, %v1166, 0
    %1273 = vmatpush.xpose.msra.mxu0 0.0
    %1274 = vmatpush.xpose.msra.mxu0 0.0
    %1275 = vmatpush.xpose.msra.mxu0 0.0
    %1276 = vmatpush.xpose.msra.mxu0 0.0
    %1277 = vmatpush.xpose.msra.mxu0 0.0
    %1278 = vmatpush.xpose.msra.mxu0 0.0
    %1279 = vmatpush.xpose.msra.mxu0 0.0
    %1280 = vmatpush.xpose.msra.mxu0 0.0
    %1281 = vmatpush.xpose.msra.mxu0 0.0
    %1282 = vmatpush.xpose.msra.mxu0 0.0
    %1283 = vmatpush.xpose.msra.mxu0 0.0
    %1284 = vmatpush.xpose.msra.mxu0 0.0
    %1285 = vmatpush.xpose.msra.mxu0 0.0
    %1286 = vmatpush.xpose.msra.mxu0 0.0
    %1287 = vmatpush.xpose.msra.mxu0 0.0
    %1288 = vmatpush.xpose.msra.mxu0 %v1271
    %1289 = vmatmul.f32.gmra.mxu0 %v1269
    %v1290 = vpop.f32.mrf.mxu0
    %v1291 = vadd.f32 0.0, %v1290
    %1292 = vdwg.mxu0
    %v1293 = vsel %vm257, %v1154, 0
    %v1295 = vsel %vm257, %v1168, 0
    %1297 = vmatpush.xpose.msra.mxu0 0.0
    %1298 = vmatpush.xpose.msra.mxu0 0.0
    %1299 = vmatpush.xpose.msra.mxu0 0.0
    %1300 = vmatpush.xpose.msra.mxu0 0.0
    %1301 = vmatpush.xpose.msra.mxu0 0.0
    %1302 = vmatpush.xpose.msra.mxu0 0.0
    %1303 = vmatpush.xpose.msra.mxu0 0.0
    %1304 = vmatpush.xpose.msra.mxu0 0.0
    %1305 = vmatpush.xpose.msra.mxu0 0.0
    %1306 = vmatpush.xpose.msra.mxu0 0.0
    %1307 = vmatpush.xpose.msra.mxu0 0.0
    %1308 = vmatpush.xpose.msra.mxu0 0.0
    %1309 = vmatpush.xpose.msra.mxu0 0.0
    %1310 = vmatpush.xpose.msra.mxu0 0.0
    %1311 = vmatpush.xpose.msra.mxu0 0.0
    %1312 = vmatpush.xpose.msra.mxu0 %v1295
    %1313 = vmatmul.f32.gmra.mxu0 %v1293
    %v1314 = vpop.f32.mrf.mxu0
    %v1315 = vadd.f32 0.0, %v1314
    %1316 = vdwg.mxu0
    %v1317 = vsel %vm257, %v1156, 0
    %v1319 = vsel %vm257, %v1170, 0
    %1321 = vmatpush.xpose.msra.mxu0 0.0
    %1322 = vmatpush.xpose.msra.mxu0 0.0
    %1323 = vmatpush.xpose.msra.mxu0 0.0
    %1324 = vmatpush.xpose.msra.mxu0 0.0
    %1325 = vmatpush.xpose.msra.mxu0 0.0
    %1326 = vmatpush.xpose.msra.mxu0 0.0
    %1327 = vmatpush.xpose.msra.mxu0 0.0
    %1328 = vmatpush.xpose.msra.mxu0 0.0
    %1329 = vmatpush.xpose.msra.mxu0 0.0
    %1330 = vmatpush.xpose.msra.mxu0 0.0
    %1331 = vmatpush.xpose.msra.mxu0 0.0
    %1332 = vmatpush.xpose.msra.mxu0 0.0
    %1333 = vmatpush.xpose.msra.mxu0 0.0
    %1334 = vmatpush.xpose.msra.mxu0 0.0
    %1335 = vmatpush.xpose.msra.mxu0 0.0
    %1336 = vmatpush.xpose.msra.mxu0 %v1319
    %1337 = vmatmul.f32.gmra.mxu0 %v1317
    %v1338 = vpop.f32.mrf.mxu0
    %v1339 = vadd.f32 0.0, %v1338
    %1340 = vdwg.mxu0
    %v1341 = vsel %vm257, %v1158, 0
    %v1343 = vsel %vm257, %v1172, 0
    %1345 = vmatpush.xpose.msra.mxu0 0.0
    %1346 = vmatpush.xpose.msra.mxu0 0.0
    %1347 = vmatpush.xpose.msra.mxu0 0.0
    %1348 = vmatpush.xpose.msra.mxu0 0.0
    %1349 = vmatpush.xpose.msra.mxu0 0.0
    %1350 = vmatpush.xpose.msra.mxu0 0.0
    %1351 = vmatpush.xpose.msra.mxu0 0.0
    %1352 = vmatpush.xpose.msra.mxu0 0.0
    %1353 = vmatpush.xpose.msra.mxu0 0.0
    %1354 = vmatpush.xpose.msra.mxu0 0.0
    %1355 = vmatpush.xpose.msra.mxu0 0.0
    %1356 = vmatpush.xpose.msra.mxu0 0.0
    %1357 = vmatpush.xpose.msra.mxu0 0.0
    %1358 = vmatpush.xpose.msra.mxu0 0.0
    %1359 = vmatpush.xpose.msra.mxu0 0.0
    %1360 = vmatpush.xpose.msra.mxu0 %v1343
    %1361 = vmatmul.f32.gmra.mxu0 %v1341
    %v1362 = vpop.f32.mrf.mxu0
    %v1363 = vadd.f32 0.0, %v1362
    %1364 = vdwg.mxu0
    %v1365 = vmul.f32 %v1195, 0.35355338
    %v1366 = vmul.f32 %v1219, 0.35355338
    %v1367 = vmul.f32 %v1243, 0.35355338
    %v1368 = vmul.f32 %v1267, 0.35355338
    %v1369 = vmul.f32 %v1291, 0.35355338
    %v1370 = vmul.f32 %v1315, 0.35355338
    %v1371 = vmul.f32 %v1339, 0.35355338
    %v1372 = vmul.f32 %v1363, 0.35355338
    %v1373 = vadd.f32 %v1365, %v1057
    %v1374 = vadd.f32 %v1366, %v1058
    %v1375 = vadd.f32 %v1367, %v1057
    %v1376 = vadd.f32 %v1368, %v1058
    %v1377 = vadd.f32 %v1369, %v1057
    %v1378 = vadd.f32 %v1370, %v1058
    %v1379 = vadd.f32 %v1371, %v1057
    %v1380 = vadd.f32 %v1372, %v1058
    %v1381 = vsel %vm257, %v1373, -inf
    %1382 = vmax.xlane.f32.xlu0 %v1381
    %v1383 = vpop.xlane.xlu0 %1382
    %v1384 = vsel %vm257, %v1374, -inf
    %1385 = vmax.xlane.f32.xlu0 %v1384
    %v1386 = vpop.xlane.xlu0 %1385
    %v1387 = vsel %vm257, %v1375, -inf
    %1388 = vmax.xlane.f32.xlu0 %v1387
    %v1389 = vpop.xlane.xlu0 %1388
    %v1390 = vsel %vm257, %v1376, -inf
    %1391 = vmax.xlane.f32.xlu0 %v1390
    %v1392 = vpop.xlane.xlu0 %1391
    %v1393 = vsel %vm257, %v1377, -inf
    %1394 = vmax.xlane.f32.xlu0 %v1393
    %v1395 = vpop.xlane.xlu0 %1394
    %v1396 = vsel %vm257, %v1378, -inf
    %1397 = vmax.xlane.f32.xlu0 %v1396
    %v1398 = vpop.xlane.xlu0 %1397
    %v1399 = vsel %vm257, %v1379, -inf
    %1400 = vmax.xlane.f32.xlu0 %v1399
    %v1401 = vpop.xlane.xlu0 %1400
    %v1402 = vsel %vm257, %v1380, -inf
    %1403 = vmax.xlane.f32.xlu0 %v1402
    %v1404 = vpop.xlane.xlu0 %1403
    %v1405 = vsub.f32 %v1373, %v1383
    %v1406 = vsub.f32 %v1374, %v1386
    %v1407 = vsub.f32 %v1375, %v1389
    %v1408 = vsub.f32 %v1376, %v1392
    %v1409 = vsub.f32 %v1377, %v1395
    %v1410 = vsub.f32 %v1378, %v1398
    %v1411 = vsub.f32 %v1379, %v1401
    %v1412 = vsub.f32 %v1380, %v1404
    %v1413 = vmul.f32 %v1405, 1.442695
    %v1414 = vpow.pop %v1413
    %v1415 = vmul.f32 %v1406, 1.442695
    %v1416 = vpow.pop %v1415
    %v1417 = vmul.f32 %v1407, 1.442695
    %v1418 = vpow.pop %v1417
    %v1419 = vmul.f32 %v1408, 1.442695
    %v1420 = vpow.pop %v1419
    %v1421 = vmul.f32 %v1409, 1.442695
    %v1422 = vpow.pop %v1421
    %v1423 = vmul.f32 %v1410, 1.442695
    %v1424 = vpow.pop %v1423
    %v1425 = vmul.f32 %v1411, 1.442695
    %v1426 = vpow.pop %v1425
    %v1427 = vmul.f32 %v1412, 1.442695
    %v1428 = vpow.pop %v1427
    %v1429 = vsel %vm257, %v1414, 0.0
    %1430 = vadd.xlane.f32.xlu0 %v1429
    %v1431 = vpop.xlane.xlu0 %1430
    %v1432 = vsel %vm257, %v1416, 0.0
    %1433 = vadd.xlane.f32.xlu0 %v1432
    %v1434 = vpop.xlane.xlu0 %1433
    %v1435 = vsel %vm257, %v1418, 0.0
    %1436 = vadd.xlane.f32.xlu0 %v1435
    %v1437 = vpop.xlane.xlu0 %1436
    %v1438 = vsel %vm257, %v1420, 0.0
    %1439 = vadd.xlane.f32.xlu0 %v1438
    %v1440 = vpop.xlane.xlu0 %1439
    %v1441 = vsel %vm257, %v1422, 0.0
    %1442 = vadd.xlane.f32.xlu0 %v1441
    %v1443 = vpop.xlane.xlu0 %1442
    %v1444 = vsel %vm257, %v1424, 0.0
    %1445 = vadd.xlane.f32.xlu0 %v1444
    %v1446 = vpop.xlane.xlu0 %1445
    %v1447 = vsel %vm257, %v1426, 0.0
    %1448 = vadd.xlane.f32.xlu0 %v1447
    %v1449 = vpop.xlane.xlu0 %1448
    %v1450 = vsel %vm257, %v1428, 0.0
    %1451 = vadd.xlane.f32.xlu0 %v1450
    %v1452 = vpop.xlane.xlu0 %1451
    %v1453 = vrcp.pop %v1431
    %v1454 = vrcp.pop %v1434
    %v1455 = vrcp.pop %v1437
    %v1456 = vrcp.pop %v1440
    %v1457 = vrcp.pop %v1443
    %v1458 = vrcp.pop %v1446
    %v1459 = vrcp.pop %v1449
    %v1460 = vrcp.pop %v1452
    %v1461 = vmul.f32 %v1414, %v1453
    %v1462 = vmul.f32 %v1416, %v1454
    %v1463 = vmul.f32 %v1418, %v1455
    %v1464 = vmul.f32 %v1420, %v1456
    %v1465 = vmul.f32 %v1422, %v1457
    %v1466 = vmul.f32 %v1424, %v1458
    %v1467 = vmul.f32 %v1426, %v1459
    %v1468 = vmul.f32 %v1428, %v1460
    %1469 = vrot.lane.b32.xlu0 %v1140, 96
    %v1470 = vpop.permute.xlu0 %1469
    %v1473 = vsel %vm257, %v1461, 0
    %1475 = vmatpush.msra.mxu0 0.0
    %1476 = vmatpush.msra.mxu0 0.0
    %1477 = vmatpush.msra.mxu0 0.0
    %1478 = vmatpush.msra.mxu0 0.0
    %1479 = vmatpush.msra.mxu0 0.0
    %1480 = vmatpush.msra.mxu0 0.0
    %1481 = vmatpush.msra.mxu0 0.0
    %1482 = vmatpush.msra.mxu0 0.0
    %1483 = vmatpush.msra.mxu0 0.0
    %1484 = vmatpush.msra.mxu0 0.0
    %1485 = vmatpush.msra.mxu0 0.0
    %1486 = vmatpush.msra.mxu0 0.0
    %1487 = vmatpush.msra.mxu0 0.0
    %1488 = vmatpush.msra.mxu0 0.0
    %1489 = vmatpush.msra.mxu0 0.0
    %1490 = vmatpush.msra.mxu0 %v1470
    %1491 = vmatmul.f32.gmra.mxu0 %v1473
    %v1492 = vpop.f32.mrf.mxu0
    %v1493 = vadd.f32 0.0, %v1492
    %1494 = vdwg.mxu0
    %1495 = vrot.lane.b32.xlu0 %v1143, 96
    %v1496 = vpop.permute.xlu0 %1495
    %v1499 = vsel %vm257, %v1462, 0
    %1501 = vmatpush.msra.mxu0 0.0
    %1502 = vmatpush.msra.mxu0 0.0
    %1503 = vmatpush.msra.mxu0 0.0
    %1504 = vmatpush.msra.mxu0 0.0
    %1505 = vmatpush.msra.mxu0 0.0
    %1506 = vmatpush.msra.mxu0 0.0
    %1507 = vmatpush.msra.mxu0 0.0
    %1508 = vmatpush.msra.mxu0 0.0
    %1509 = vmatpush.msra.mxu0 0.0
    %1510 = vmatpush.msra.mxu0 0.0
    %1511 = vmatpush.msra.mxu0 0.0
    %1512 = vmatpush.msra.mxu0 0.0
    %1513 = vmatpush.msra.mxu0 0.0
    %1514 = vmatpush.msra.mxu0 0.0
    %1515 = vmatpush.msra.mxu0 0.0
    %1516 = vmatpush.msra.mxu0 %v1496
    %1517 = vmatmul.f32.gmra.mxu0 %v1499
    %v1518 = vpop.f32.mrf.mxu0
    %v1519 = vadd.f32 0.0, %v1518
    %1520 = vdwg.mxu0
    %1521 = vrot.lane.b32.xlu0 %v1162, 96
    %v1522 = vpop.permute.xlu0 %1521
    %v1525 = vsel %vm257, %v1463, 0
    %1527 = vmatpush.msra.mxu0 0.0
    %1528 = vmatpush.msra.mxu0 0.0
    %1529 = vmatpush.msra.mxu0 0.0
    %1530 = vmatpush.msra.mxu0 0.0
    %1531 = vmatpush.msra.mxu0 0.0
    %1532 = vmatpush.msra.mxu0 0.0
    %1533 = vmatpush.msra.mxu0 0.0
    %1534 = vmatpush.msra.mxu0 0.0
    %1535 = vmatpush.msra.mxu0 0.0
    %1536 = vmatpush.msra.mxu0 0.0
    %1537 = vmatpush.msra.mxu0 0.0
    %1538 = vmatpush.msra.mxu0 0.0
    %1539 = vmatpush.msra.mxu0 0.0
    %1540 = vmatpush.msra.mxu0 0.0
    %1541 = vmatpush.msra.mxu0 0.0
    %1542 = vmatpush.msra.mxu0 %v1522
    %1543 = vmatmul.f32.gmra.mxu0 %v1525
    %v1544 = vpop.f32.mrf.mxu0
    %v1545 = vadd.f32 0.0, %v1544
    %1546 = vdwg.mxu0
    %1547 = vrot.lane.b32.xlu0 %v1164, 96
    %v1548 = vpop.permute.xlu0 %1547
    %v1551 = vsel %vm257, %v1464, 0
    %1553 = vmatpush.msra.mxu0 0.0
    %1554 = vmatpush.msra.mxu0 0.0
    %1555 = vmatpush.msra.mxu0 0.0
    %1556 = vmatpush.msra.mxu0 0.0
    %1557 = vmatpush.msra.mxu0 0.0
    %1558 = vmatpush.msra.mxu0 0.0
    %1559 = vmatpush.msra.mxu0 0.0
    %1560 = vmatpush.msra.mxu0 0.0
    %1561 = vmatpush.msra.mxu0 0.0
    %1562 = vmatpush.msra.mxu0 0.0
    %1563 = vmatpush.msra.mxu0 0.0
    %1564 = vmatpush.msra.mxu0 0.0
    %1565 = vmatpush.msra.mxu0 0.0
    %1566 = vmatpush.msra.mxu0 0.0
    %1567 = vmatpush.msra.mxu0 0.0
    %1568 = vmatpush.msra.mxu0 %v1548
    %1569 = vmatmul.f32.gmra.mxu0 %v1551
    %v1570 = vpop.f32.mrf.mxu0
    %v1571 = vadd.f32 0.0, %v1570
    %1572 = vdwg.mxu0
    %1573 = vrot.lane.b32.xlu0 %v1166, 96
    %v1574 = vpop.permute.xlu0 %1573
    %v1577 = vsel %vm257, %v1465, 0
    %1579 = vmatpush.msra.mxu0 0.0
    %1580 = vmatpush.msra.mxu0 0.0
    %1581 = vmatpush.msra.mxu0 0.0
    %1582 = vmatpush.msra.mxu0 0.0
    %1583 = vmatpush.msra.mxu0 0.0
    %1584 = vmatpush.msra.mxu0 0.0
    %1585 = vmatpush.msra.mxu0 0.0
    %1586 = vmatpush.msra.mxu0 0.0
    %1587 = vmatpush.msra.mxu0 0.0
    %1588 = vmatpush.msra.mxu0 0.0
    %1589 = vmatpush.msra.mxu0 0.0
    %1590 = vmatpush.msra.mxu0 0.0
    %1591 = vmatpush.msra.mxu0 0.0
    %1592 = vmatpush.msra.mxu0 0.0
    %1593 = vmatpush.msra.mxu0 0.0
    %1594 = vmatpush.msra.mxu0 %v1574
    %1595 = vmatmul.f32.gmra.mxu0 %v1577
    %v1596 = vpop.f32.mrf.mxu0
    %v1597 = vadd.f32 0.0, %v1596
    %1598 = vdwg.mxu0
    %1599 = vrot.lane.b32.xlu0 %v1168, 96
    %v1600 = vpop.permute.xlu0 %1599
    %v1603 = vsel %vm257, %v1466, 0
    %1605 = vmatpush.msra.mxu0 0.0
    %1606 = vmatpush.msra.mxu0 0.0
    %1607 = vmatpush.msra.mxu0 0.0
    %1608 = vmatpush.msra.mxu0 0.0
    %1609 = vmatpush.msra.mxu0 0.0
    %1610 = vmatpush.msra.mxu0 0.0
    %1611 = vmatpush.msra.mxu0 0.0
    %1612 = vmatpush.msra.mxu0 0.0
    %1613 = vmatpush.msra.mxu0 0.0
    %1614 = vmatpush.msra.mxu0 0.0
    %1615 = vmatpush.msra.mxu0 0.0
    %1616 = vmatpush.msra.mxu0 0.0
    %1617 = vmatpush.msra.mxu0 0.0
    %1618 = vmatpush.msra.mxu0 0.0
    %1619 = vmatpush.msra.mxu0 0.0
    %1620 = vmatpush.msra.mxu0 %v1600
    %1621 = vmatmul.f32.gmra.mxu0 %v1603
    %v1622 = vpop.f32.mrf.mxu0
    %v1623 = vadd.f32 0.0, %v1622
    %1624 = vdwg.mxu0
    %1625 = vrot.lane.b32.xlu0 %v1170, 96
    %v1626 = vpop.permute.xlu0 %1625
    %v1629 = vsel %vm257, %v1467, 0
    %1631 = vmatpush.msra.mxu0 0.0
    %1632 = vmatpush.msra.mxu0 0.0
    %1633 = vmatpush.msra.mxu0 0.0
    %1634 = vmatpush.msra.mxu0 0.0
    %1635 = vmatpush.msra.mxu0 0.0
    %1636 = vmatpush.msra.mxu0 0.0
    %1637 = vmatpush.msra.mxu0 0.0
    %1638 = vmatpush.msra.mxu0 0.0
    %1639 = vmatpush.msra.mxu0 0.0
    %1640 = vmatpush.msra.mxu0 0.0
    %1641 = vmatpush.msra.mxu0 0.0
    %1642 = vmatpush.msra.mxu0 0.0
    %1643 = vmatpush.msra.mxu0 0.0
    %1644 = vmatpush.msra.mxu0 0.0
    %1645 = vmatpush.msra.mxu0 0.0
    %1646 = vmatpush.msra.mxu0 %v1626
    %1647 = vmatmul.f32.gmra.mxu0 %v1629
    %v1648 = vpop.f32.mrf.mxu0
    %v1649 = vadd.f32 0.0, %v1648
    %1650 = vdwg.mxu0
    %1651 = vrot.lane.b32.xlu0 %v1172, 96
    %v1652 = vpop.permute.xlu0 %1651
    %v1655 = vsel %vm257, %v1468, 0
    %1657 = vmatpush.msra.mxu0 0.0
    %1658 = vmatpush.msra.mxu0 0.0
    %1659 = vmatpush.msra.mxu0 0.0
    %1660 = vmatpush.msra.mxu0 0.0
    %1661 = vmatpush.msra.mxu0 0.0
    %1662 = vmatpush.msra.mxu0 0.0
    %1663 = vmatpush.msra.mxu0 0.0
    %1664 = vmatpush.msra.mxu0 0.0
    %1665 = vmatpush.msra.mxu0 0.0
    %1666 = vmatpush.msra.mxu0 0.0
    %1667 = vmatpush.msra.mxu0 0.0
    %1668 = vmatpush.msra.mxu0 0.0
    %1669 = vmatpush.msra.mxu0 0.0
    %1670 = vmatpush.msra.mxu0 0.0
    %1671 = vmatpush.msra.mxu0 0.0
    %1672 = vmatpush.msra.mxu0 %v1652
    %1673 = vmatmul.f32.gmra.mxu0 %v1655
    %v1674 = vpop.f32.mrf.mxu0
    %v1675 = vadd.f32 0.0, %v1674
    %1676 = vdwg.mxu0
    %1679 = vrot.lane.b32.xlu0 %v1545, 8
    %v1680 = vpop.permute.xlu0 %1679
    %1681 = vrot.lane.b32.xlu0 %v1571, 8
    %v1682 = vpop.permute.xlu0 %1681
    %1687 = vrot.lane.b32.xlu0 %v1597, 16
    %v1688 = vpop.permute.xlu0 %1687
    %1689 = vrot.lane.b32.xlu0 %v1623, 16
    %v1690 = vpop.permute.xlu0 %1689
    %1695 = vrot.lane.b32.xlu0 %v1649, 24
    %v1696 = vpop.permute.xlu0 %1695
    %1697 = vrot.lane.b32.xlu0 %v1675, 24
    %v1698 = vpop.permute.xlu0 %1697
    %v1701 = vsel %vm257, %v1493, %v1680
    %v1702 = vsel %vm257, %v1519, %v1682
    %v1703 = vsel %vm802, %v1701, %v1688
    %v1704 = vsel %vm802, %v1702, %v1690
    %v1705 = vsel %vm805, %v1703, %v1696
    %v1706 = vsel %vm805, %v1704, %v1698
    %v1707 = vld [vmem:[#allocation2 + $0x20] sm:$0xff]
    %v1708 = vld [vmem:[#allocation2 + $0x28] sm:$0xff]
    %v1709 = vld [vmem:[#allocation2 + $0x30] sm:$0xff]
    %v1710 = vld [vmem:[#allocation2 + $0x38] sm:$0xff]
    %v1711 = vld [vmem:[#allocation2 + $0xc5] sm:$0x1]
    %v1712 = vperm.slane %v1711, 0
    %1717 = vrot.lane.b32.xlu0 %v1707, 32
    %v1718 = vpop.permute.xlu0 %1717
    %1719 = vrot.lane.b32.xlu0 %v1708, 32
    %v1720 = vpop.permute.xlu0 %1719
    %1721 = vrot.lane.b32.xlu0 %v1709, 32
    %v1722 = vpop.permute.xlu0 %1721
    %1723 = vrot.lane.b32.xlu0 %v1710, 32
    %v1724 = vpop.permute.xlu0 %1723
    %1730 = vrot.lane.b32.xlu0 %v1712, 64
    %v1731 = vpop.permute.xlu0 %1730
    %v1734 = vsel %vm211, %v1705, 0
    %v1737 = vsel %vm211, %v1706, 0
    %1739 = vmatpush.msra.mxu0 0.0
    %1740 = vmatpush.msra.mxu0 0.0
    %1741 = vmatpush.msra.mxu0 0.0
    %1742 = vmatpush.msra.mxu0 0.0
    %1743 = vmatpush.msra.mxu0 0.0
    %1744 = vmatpush.msra.mxu0 0.0
    %1745 = vmatpush.msra.mxu0 0.0
    %1746 = vmatpush.msra.mxu0 0.0
    %1747 = vmatpush.msra.mxu0 0.0
    %1748 = vmatpush.msra.mxu0 0.0
    %1749 = vmatpush.msra.mxu0 0.0
    %1750 = vmatpush.msra.mxu0 0.0
    %1751 = vmatpush.msra.mxu0 %v1724
    %1752 = vmatpush.msra.mxu0 %v1722
    %1753 = vmatpush.msra.mxu0 %v1720
    %1754 = vmatpush.msra.mxu0 %v1718
    %1755 = vmatmul.f32.gmra.mxu0 %v1734
    %v1756 = vpop.f32.mrf.mxu0
    %v1757 = vadd.f32 %v1731, %v1756
    %1758 = vmatmul.f32.gmra.mxu0 %v1737
    %v1759 = vpop.f32.mrf.mxu0
    %v1760 = vadd.f32 %v1731, %v1759
    %1761 = vdwg.mxu0
    %v1762 = vadd.f32 %v1757, %v1757
    %v1763 = vadd.f32 %v1760, %v1760
    %v1764 = vld [vmem:[#allocation2 + $0xc6] sm:$0x1]
    %v1765 = vsel %vm211, %v1762, 0.0
    %1766 = vadd.xlane.f32.xlu0 %v1765
    %v1767 = vpop.xlane.xlu0 %1766
    %v1768 = vsel %vm211, %v1763, 0.0
    %1769 = vadd.xlane.f32.xlu0 %v1768
    %v1770 = vpop.xlane.xlu0 %1769
    %v1771 = vmul.f32 %v1767, %v873
    %v1772 = vmul.f32 %v1770, %v873
    %v1773 = vsub.f32 %v1762, %v1771
    %v1774 = vsub.f32 %v1763, %v1772
    %v1775 = vmul.f32 %v1773, %v1773
    %v1776 = vmul.f32 %v1774, %v1774
    %v1777 = vsel %vm211, %v1775, 0.0
    %1778 = vadd.xlane.f32.xlu0 %v1777
    %v1779 = vpop.xlane.xlu0 %1778
    %v1780 = vsel %vm211, %v1776, 0.0
    %1781 = vadd.xlane.f32.xlu0 %v1780
    %v1782 = vpop.xlane.xlu0 %1781
    %v1783 = vmul.f32 %v1779, %v873
    %v1784 = vmul.f32 %v1782, %v873
    %v1785 = vadd.f32 %v1783, 1e-05
    %v1786 = vadd.f32 %v1784, 1e-05
    %v1787 = vrsqrt.pop %v1785
    %v1788 = vmul.f32 %v1787, %v1785
    %v1789 = vmul.f32 %v1788, %v1787
    %v1790 = vmul.f32 0.5, %v1789
    %v1791 = vsub.f32 1.5, %v1790
    %v1792 = vmul.f32 %v1787, %v1791
    %vm1793 = vweird.f32 %v1785
    %vm1794 = vweird.f32 %v1787
    %vm1795 = vmor %vm1793, %vm1794
    %v1796 = vsel %vm1795, %v1787, %v1792
    %v1797 = vrsqrt.pop %v1786
    %v1798 = vmul.f32 %v1797, %v1786
    %v1799 = vmul.f32 %v1798, %v1797
    %v1800 = vmul.f32 0.5, %v1799
    %v1801 = vsub.f32 1.5, %v1800
    %v1802 = vmul.f32 %v1797, %v1801
    %vm1803 = vweird.f32 %v1786
    %vm1804 = vweird.f32 %v1797
    %vm1805 = vmor %vm1803, %vm1804
    %v1806 = vsel %vm1805, %v1797, %v1802
    %v1807 = vmul.f32 %v1773, %v1796
    %v1808 = vmul.f32 %v1774, %v1806
    %1809 = vrot.lane.b32.xlu0 %v1712, 32
    %v1810 = vpop.permute.xlu0 %1809
    %v1812 = vmul.f32 %v1807, %v1810
    %v1813 = vmul.f32 %v1808, %v1810
    %v1814 = vperm.slane %v1764, 0
    %v1815 = vadd.f32 %v1812, %v1814
    %v1816 = vadd.f32 %v1813, %v1814
    %v1817 = vld [vmem:[#allocation2 + $0x40] sm:$0xff]
    %v1818 = vld [vmem:[#allocation2 + $0x48] sm:$0xff]
    %v1819 = vld [vmem:[#allocation2 + $0x50] sm:$0xff]
    %v1820 = vld [vmem:[#allocation2 + $0x58] sm:$0xff]
    %v1821 = vld [vmem:[#allocation2 + $0xc1] sm:$0x1]
    %v1822 = vperm.slane %v1821, 0
    %1827 = vrot.lane.b32.xlu0 %v1817, 64
    %v1828 = vpop.permute.xlu0 %1827
    %1829 = vrot.lane.b32.xlu0 %v1818, 64
    %v1830 = vpop.permute.xlu0 %1829
    %1831 = vrot.lane.b32.xlu0 %v1819, 64
    %v1832 = vpop.permute.xlu0 %1831
    %1833 = vrot.lane.b32.xlu0 %v1820, 64
    %v1834 = vpop.permute.xlu0 %1833
    %1840 = vrot.lane.b32.xlu0 %v1822, 64
    %v1841 = vpop.permute.xlu0 %1840
    %v1844 = vsel %vm211, %v1815, 0
    %v1847 = vsel %vm211, %v1816, 0
    %1849 = vmatpush.msra.mxu0 0.0
    %1850 = vmatpush.msra.mxu0 0.0
    %1851 = vmatpush.msra.mxu0 0.0
    %1852 = vmatpush.msra.mxu0 0.0
    %1853 = vmatpush.msra.mxu0 0.0
    %1854 = vmatpush.msra.mxu0 0.0
    %1855 = vmatpush.msra.mxu0 0.0
    %1856 = vmatpush.msra.mxu0 0.0
    %1857 = vmatpush.msra.mxu0 0.0
    %1858 = vmatpush.msra.mxu0 0.0
    %1859 = vmatpush.msra.mxu0 0.0
    %1860 = vmatpush.msra.mxu0 0.0
    %1861 = vmatpush.msra.mxu0 %v1834
    %1862 = vmatpush.msra.mxu0 %v1832
    %1863 = vmatpush.msra.mxu0 %v1830
    %1864 = vmatpush.msra.mxu0 %v1828
    %1865 = vmatmul.f32.gmra.mxu0 %v1844
    %v1866 = vpop.f32.mrf.mxu0
    %v1867 = vadd.f32 %v1841, %v1866
    %1868 = vmatmul.f32.gmra.mxu0 %v1847
    %v1869 = vpop.f32.mrf.mxu0
    %v1870 = vadd.f32 %v1841, %v1869
    %1871 = vdwg.mxu0
    %v1872 = vmax.f32 %v1867, 0.0
    %v1873 = vmax.f32 %v1870, 0.0
    %v1874 = vld [vmem:[#allocation2 + $0x80] sm:$0xff]
    %v1875 = vld [vmem:[#allocation2 + $0x88] sm:$0xff]
    %v1876 = vld [vmem:[#allocation2 + $0x90] sm:$0xff]
    %v1877 = vld [vmem:[#allocation2 + $0x98] sm:$0xff]
    %v1878 = vld [vmem:[#allocation2 + $0xa0] sm:$0xff]
    %v1879 = vld [vmem:[#allocation2 + $0xa8] sm:$0xff]
    %v1880 = vld [vmem:[#allocation2 + $0xb0] sm:$0xff]
    %v1881 = vld [vmem:[#allocation2 + $0xb8] sm:$0xff]
    %1890 = vrot.lane.b32.xlu0 %v1874, 96
    %v1891 = vpop.permute.xlu0 %1890
    %1892 = vrot.lane.b32.xlu0 %v1875, 96
    %v1893 = vpop.permute.xlu0 %1892
    %1894 = vrot.lane.b32.xlu0 %v1876, 96
    %v1895 = vpop.permute.xlu0 %1894
    %1896 = vrot.lane.b32.xlu0 %v1877, 96
    %v1897 = vpop.permute.xlu0 %1896
    %1898 = vrot.lane.b32.xlu0 %v1878, 96
    %v1899 = vpop.permute.xlu0 %1898
    %1900 = vrot.lane.b32.xlu0 %v1879, 96
    %v1901 = vpop.permute.xlu0 %1900
    %1902 = vrot.lane.b32.xlu0 %v1880, 96
    %v1903 = vpop.permute.xlu0 %1902
    %1904 = vrot.lane.b32.xlu0 %v1881, 96
    %v1905 = vpop.permute.xlu0 %1904
    %1915 = vrot.lane.b32.xlu0 %v1814, 96
    %v1916 = vpop.permute.xlu0 %1915
    %v1919 = vsel %vm971, %v1872, 0
    %v1922 = vsel %vm971, %v1873, 0
    %1924 = vmatpush.msra.mxu0 0.0
    %1925 = vmatpush.msra.mxu0 0.0
    %1926 = vmatpush.msra.mxu0 0.0
    %1927 = vmatpush.msra.mxu0 0.0
    %1928 = vmatpush.msra.mxu0 0.0
    %1929 = vmatpush.msra.mxu0 0.0
    %1930 = vmatpush.msra.mxu0 0.0
    %1931 = vmatpush.msra.mxu0 0.0
    %1932 = vmatpush.msra.mxu0 %v1905
    %1933 = vmatpush.msra.mxu0 %v1903
    %1934 = vmatpush.msra.mxu0 %v1901
    %1935 = vmatpush.msra.mxu0 %v1899
    %1936 = vmatpush.msra.mxu0 %v1897
    %1937 = vmatpush.msra.mxu0 %v1895
    %1938 = vmatpush.msra.mxu0 %v1893
    %1939 = vmatpush.msra.mxu0 %v1891
    %1940 = vmatmul.f32.gmra.mxu0 %v1919
    %v1941 = vpop.f32.mrf.mxu0
    %v1942 = vadd.f32 %v1916, %v1941
    %1943 = vmatmul.f32.gmra.mxu0 %v1922
    %v1944 = vpop.f32.mrf.mxu0
    %v1945 = vadd.f32 %v1916, %v1944
    %1946 = vdwg.mxu0
    %v1947 = vadd.f32 %v1815, %v1942
    %v1948 = vadd.f32 %v1816, %v1945
    %v1949 = vsel %vm211, %v1947, 0.0
    %1950 = vadd.xlane.f32.xlu0 %v1949
    %v1951 = vpop.xlane.xlu0 %1950
    %v1952 = vsel %vm211, %v1948, 0.0
    %1953 = vadd.xlane.f32.xlu0 %v1952
    %v1954 = vpop.xlane.xlu0 %1953
    %v1955 = vmul.f32 %v1951, %v873
    %v1956 = vmul.f32 %v1954, %v873
    %v1957 = vsub.f32 %v1947, %v1955
    %v1958 = vsub.f32 %v1948, %v1956
    %v1959 = vmul.f32 %v1957, %v1957
    %v1960 = vmul.f32 %v1958, %v1958
    %v1961 = vsel %vm211, %v1959, 0.0
    %1962 = vadd.xlane.f32.xlu0 %v1961
    %v1963 = vpop.xlane.xlu0 %1962
    %v1964 = vsel %vm211, %v1960, 0.0
    %1965 = vadd.xlane.f32.xlu0 %v1964
    %v1966 = vpop.xlane.xlu0 %1965
    %v1967 = vmul.f32 %v1963, %v873
    %v1968 = vmul.f32 %v1966, %v873
    %v1969 = vadd.f32 %v1967, 1e-05
    %v1970 = vadd.f32 %v1968, 1e-05
    %v1971 = vrsqrt.pop %v1969
    %v1972 = vmul.f32 %v1971, %v1969
    %v1973 = vmul.f32 %v1972, %v1971
    %v1974 = vmul.f32 0.5, %v1973
    %v1975 = vsub.f32 1.5, %v1974
    %v1976 = vmul.f32 %v1971, %v1975
    %vm1977 = vweird.f32 %v1969
    %vm1978 = vweird.f32 %v1971
    %vm1979 = vmor %vm1977, %vm1978
    %v1980 = vsel %vm1979, %v1971, %v1976
    %v1981 = vrsqrt.pop %v1970
    %v1982 = vmul.f32 %v1981, %v1970
    %v1983 = vmul.f32 %v1982, %v1981
    %v1984 = vmul.f32 0.5, %v1983
    %v1985 = vsub.f32 1.5, %v1984
    %v1986 = vmul.f32 %v1981, %v1985
    %vm1987 = vweird.f32 %v1970
    %vm1988 = vweird.f32 %v1981
    %vm1989 = vmor %vm1987, %vm1988
    %v1990 = vsel %vm1989, %v1981, %v1986
    %v1991 = vmul.f32 %v1957, %v1980
    %v1992 = vmul.f32 %v1958, %v1990
    %1993 = vrot.lane.b32.xlu0 %v1814, 64
    %v1994 = vpop.permute.xlu0 %1993
    %v1996 = vmul.f32 %v1991, %v1994
    %v1997 = vmul.f32 %v1992, %v1994
    %1998 = vrot.lane.b32.xlu0 %v1814, 32
    %v1999 = vpop.permute.xlu0 %1998
    %v2001 = vadd.f32 %v1996, %v1999
    %v2002 = vadd.f32 %v1997, %v1999
    %v2003 = vld [vmem:[#allocation2 + $0x60] sm:$0xff]
    %v2004 = vld [vmem:[#allocation2 + $0x68] sm:$0xff]
    %v2005 = vld [vmem:[#allocation2 + $0x70] sm:$0xff]
    %v2006 = vld [vmem:[#allocation2 + $0x78] sm:$0xff]
    %v2007 = vld [vmem:[#allocation2 + $0xc3] sm:$0x1]
    %v2008 = vperm.slane %v2007, 0
    %v2010 = vsel %vm211, %v2001, 0
    %v2013 = vsel %vm211, %v2002, 0
    %2015 = vmatpush.msra.mxu0 0.0
    %2016 = vmatpush.msra.mxu0 0.0
    %2017 = vmatpush.msra.mxu0 0.0
    %2018 = vmatpush.msra.mxu0 0.0
    %2019 = vmatpush.msra.mxu0 0.0
    %2020 = vmatpush.msra.mxu0 0.0
    %2021 = vmatpush.msra.mxu0 0.0
    %2022 = vmatpush.msra.mxu0 0.0
    %2023 = vmatpush.msra.mxu0 0.0
    %2024 = vmatpush.msra.mxu0 0.0
    %2025 = vmatpush.msra.mxu0 0.0
    %2026 = vmatpush.msra.mxu0 0.0
    %2027 = vmatpush.msra.mxu0 %v2006
    %2028 = vmatpush.msra.mxu0 %v2005
    %2029 = vmatpush.msra.mxu0 %v2004
    %2030 = vmatpush.msra.mxu0 %v2003
    %2031 = vmatmul.f32.gmra.mxu0 %v2010
    %v2032 = vpop.f32.mrf.mxu0
    %v2033 = vadd.f32 %v2008, %v2032
    %2034 = vmatmul.f32.gmra.mxu0 %v2013
    %v2035 = vpop.f32.mrf.mxu0
    %v2036 = vadd.f32 %v2008, %v2035
    %2037 = vdwg.mxu0
    %2038 = vmax.xlane.f32.xlu0 %v2033
    %v2039 = vpop.xlane.xlu0 %2038
    %2040 = vmax.xlane.f32.xlu0 %v2036
    %v2041 = vpop.xlane.xlu0 %2040
    %v2042 = vsub.f32 %v2033, %v2039
    %v2043 = vsub.f32 %v2036, %v2041
    %v2044 = vmul.f32 %v2042, 1.442695
    %v2045 = vpow.pop %v2044
    %v2046 = vmul.f32 %v2043, 1.442695
    %v2047 = vpow.pop %v2046
    %2048 = vadd.xlane.f32.xlu0 %v2045
    %v2049 = vpop.xlane.xlu0 %2048
    %2050 = vadd.xlane.f32.xlu0 %v2047
    %v2051 = vpop.xlane.xlu0 %2050
    %v2052 = vlog2.pop %v2049
    %v2053 = vmul.f32 %v2052, 0.6931472
    %v2054 = vlog2.pop %v2051
    %v2055 = vmul.f32 %v2054, 0.6931472
    %v2056 = vadd.f32 %v2039, %v2053
    %v2057 = vadd.f32 %v2041, %v2055
    %v2058 = vsub.f32 %v2033, %v2056
    %v2059 = vsub.f32 %v2036, %v2057
    %2060 = vst [vmem:[#allocation5] sm:$0xff] %v2058
    %2061 = vst [vmem:[#allocation5 + $0x8] sm:$0xff] %v2059
    // Predicated region
    $region18: #{tpu_custom_call.1} parent=1 // pred_check
      _
    $region19: #{tpu_custom_call.1} parent=1 // pred_check_branch
      %2063 = sbr.rel (0) target = $region21
    $region20: #{tpu_custom_call.1} parent=1 // pred_region
      %2065 = vsyncadd [#allocation4], 0
      %s2066 = sshll.u32 [#allocation5], 4
      %s2067 = int_to_ptr.vmem [resolvable:$true] %s2066
      %s2068 = sshll.u32 %s3, 4
      %s2069 = int_to_ptr.hbm [resolvable:$true] %s2068
      %2074 = dma.vmem_to_hbm [thread:$0]  %s2067, 256, %s2069, [#allocation4], 128, 128, 8
    $region21: #{tpu_custom_call.1} parent=1 // pred_fallthru
      _
    // Predicated region
    $region22: #{tpu_custom_call.1} parent=1 // pred_check
      _
    $region23: #{tpu_custom_call.1} parent=1 // pred_check_branch
      %2076 = sbr.rel (0) target = $region25
    $region24: #{tpu_custom_call.1} parent=1 // pred_region
      %2078 = dma.done [#allocation4], 256
    $region25: #{tpu_custom_call.1} parent=1 // pred_fallthru
      _
    %2079 = vsyncpa [#allocation3], 1
    %2080 = vsyncpa [#allocation4], 1

</llo_original>
